<compile_context>
chip_gen: v7x
topology: tpu7x:2x2x1
jax: 0.10.0
libtpu: 0.0.40
codegen_flags: <defaults>
</compile_context>

<pallas_src>
import functools

import jax
import jax.numpy as jnp
from jax.experimental import pallas as pl
from jax.experimental.pallas import tpu as pltpu

# ---------------------------------------------------------------------------
# Small-model config (scaled-down RoBERTa-base; real model: H=768, 12 layers).
# ---------------------------------------------------------------------------
VOCAB = 100
MAX_POS = 64
TYPE_VOCAB = 2
HIDDEN = 128
NUM_HEADS = 2
HEAD_DIM = HIDDEN // NUM_HEADS
INTERMEDIATE = 256
NUM_LAYERS = 2
NUM_CLASSES = 2
CLS_PAD = 128            # lane-dense classifier output width; real logits are [:, :NUM_CLASSES]
PAD_IDX = 1
LN_EPS = 1e-5


# ---------------------------------------------------------------------------
# Shared in-kernel helpers
# ---------------------------------------------------------------------------
def _ln(x, g, b, eps):
    mu = jnp.mean(x, axis=-1, keepdims=True)
    xc = x - mu
    var = jnp.mean(xc * xc, axis=-1, keepdims=True)
    return xc * jax.lax.rsqrt(var + eps) * g + b


# ---------------------------------------------------------------------------
# Fused encoder kernel: grid = (batch, layer); activation block resident across layers.
# ---------------------------------------------------------------------------
def _encoder_kernel(emb_ref, mask_ref, eg_ref, eb_ref,
                    qkv_w_ref, qkv_b_ref, o_w_ref, o_b_ref, ln1_g_ref, ln1_b_ref,
                    i_w_ref, i_b_ref, f_w_ref, f_b_ref, ln2_g_ref, ln2_b_ref,
                    o_ref, *, scale, num_heads, head_dim, eps):
    l = pl.program_id(1)

    @pl.when(l == 0)
    def _():
        # Embedding LayerNorm initializes the resident (S, H) activation block.
        o_ref[...] = _ln(emb_ref[...], eg_ref[...], eb_ref[...], eps)

    x = o_ref[...]                                          # (S, H) f32, resident across l
    H = num_heads * head_dim

    # --- fused Q|K|V projection (bf16 MXU operands, f32 accumulation) ---
    qkv = jnp.dot(x.astype(jnp.bfloat16), qkv_w_ref[0],
                  preferred_element_type=jnp.float32) + qkv_b_ref[0]
    qkv = qkv.astype(jnp.bfloat16)                          # (S, 3H)

    mask = mask_ref[0]                                      # (1, S) additive key mask, f32
    o_w = o_w_ref[0]                                        # (H, H) bf16

    # --- multi-head self-attention; heads merged by accumulating per-head O-proj ---
    attn = o_b_ref[0]                                       # (1, H), broadcasts on first add
    for h in range(num_heads):                              # static unroll over heads
        q = qkv[:, h * head_dim:(h + 1) * head_dim]                     # (S, dh)
        k = qkv[:, H + h * head_dim:H + (h + 1) * head_dim]             # (S, dh)
        v = qkv[:, 2 * H + h * head_dim:2 * H + (h + 1) * head_dim]     # (S, dh)
        s = jax.lax.dot_general(q, k, (((1,), (1,)), ((), ())),
                                preferred_element_type=jnp.float32) * scale
        s = s + mask                                        # broadcast over query rows
        s = s - jnp.max(s, axis=-1, keepdims=True)
        p = jnp.exp(s)
        p = p * pl.reciprocal(jnp.sum(p, axis=-1, keepdims=True), approx=True)
        ctx = jnp.dot(p.astype(jnp.bfloat16), v, preferred_element_type=jnp.float32)
        attn = attn + jnp.dot(ctx.astype(jnp.bfloat16),
                              o_w[h * head_dim:(h + 1) * head_dim, :],
                              preferred_element_type=jnp.float32)

    x = _ln(attn + x, ln1_g_ref[0], ln1_b_ref[0], eps)      # post-attention LN (residual)

    # --- FFN: up-proj + GELU + down-proj + residual + LN ---
    h1 = jnp.dot(x.astype(jnp.bfloat16), i_w_ref[0],
                 preferred_element_type=jnp.float32) + i_b_ref[0]
    # TODO(synk): HF RoBERTa uses exact-erf GELU; tanh approximation differs by <1e-3/elem.
    h1 = jax.nn.gelu(h1, approximate=True)
    h2 = jnp.dot(h1.astype(jnp.bfloat16), f_w_ref[0],
                 preferred_element_type=jnp.float32) + f_b_ref[0]
    o_ref[...] = _ln(h2 + x, ln2_g_ref[0], ln2_b_ref[0], eps)


def roberta_encoder(emb2d, add_mask, params, B, S):
    """emb2d:(B*S,H) f32 raw embedding sums, add_mask:(B,1,S) f32 -> (B*S,H) f32."""
    H, I, L = HIDDEN, INTERMEDIATE, NUM_LAYERS
    kern = functools.partial(_encoder_kernel, scale=1.0 / (HEAD_DIM ** 0.5),
                             num_heads=NUM_HEADS, head_dim=HEAD_DIM, eps=LN_EPS)
    return pl.pallas_call(
        kern,
        out_shape=jax.ShapeDtypeStruct((B * S, H), jnp.float32),
        grid=(B, L),
        in_specs=[
            pl.BlockSpec((S, H), lambda b, l: (b, 0)),            # raw embeddings (per batch)
            pl.BlockSpec((1, 1, S), lambda b, l: (b, 0, 0)),      # additive key mask
            pl.BlockSpec((1, H), lambda b, l: (0, 0)),            # emb LN gamma
            pl.BlockSpec((1, H), lambda b, l: (0, 0)),            # emb LN beta
            pl.BlockSpec((1, H, 3 * H), lambda b, l: (l, 0, 0)),  # qkv_w (stacked, bf16)
            pl.BlockSpec((1, 1, 3 * H), lambda b, l: (l, 0, 0)),  # qkv_b
            pl.BlockSpec((1, H, H), lambda b, l: (l, 0, 0)),      # o_w (bf16)
            pl.BlockSpec((1, 1, H), lambda b, l: (l, 0, 0)),      # o_b
            pl.BlockSpec((1, 1, H), lambda b, l: (l, 0, 0)),      # ln1_g
            pl.BlockSpec((1, 1, H), lambda b, l: (l, 0, 0)),      # ln1_b
            pl.BlockSpec((1, H, I), lambda b, l: (l, 0, 0)),      # i_w (bf16)
            pl.BlockSpec((1, 1, I), lambda b, l: (l, 0, 0)),      # i_b
            pl.BlockSpec((1, I, H), lambda b, l: (l, 0, 0)),      # f_w (bf16)
            pl.BlockSpec((1, 1, H), lambda b, l: (l, 0, 0)),      # f_b
            pl.BlockSpec((1, 1, H), lambda b, l: (l, 0, 0)),      # ln2_g
            pl.BlockSpec((1, 1, H), lambda b, l: (l, 0, 0)),      # ln2_b
        ],
        out_specs=pl.BlockSpec((S, H), lambda b, l: (b, 0)),      # resident across layer axis
        compiler_params=pltpu.CompilerParams(
            dimension_semantics=("parallel", "arbitrary")),
    )(emb2d, add_mask,
      params["emb_ln_g"].reshape(1, H), params["emb_ln_b"].reshape(1, H),
      params["qkv_w"], params["qkv_b"], params["o_w"], params["o_b"],
      params["ln1_g"], params["ln1_b"],
      params["i_w"], params["i_b"], params["f_w"], params["f_b"],
      params["ln2_g"], params["ln2_b"])


# ---------------------------------------------------------------------------
# Fused pooler (tanh dense on CLS) + Dropout(0.3, identity) + classifier head.
# ---------------------------------------------------------------------------
def _head_kernel(cls_ref, pw_ref, pb_ref, cw_ref, cb_ref, o_ref):
    pooled = jnp.tanh(jnp.dot(cls_ref[...].astype(jnp.bfloat16), pw_ref[...],
                              preferred_element_type=jnp.float32) + pb_ref[...])
    # classifier into a 128-lane padded slab (lane-dense store; real logits in [:, :2]).
    logits = jnp.dot(pooled.astype(jnp.bfloat16), cw_ref[...],
                     preferred_element_type=jnp.float32) + cb_ref[...]
    o_ref[...] = logits


def pooler_classifier(cls_tok, pool_w, pool_b, cls_w_pad, cls_b_pad):
    """cls_tok:(B,H) f32 -> logits (B, NUM_CLASSES) f32 (fused pooler + classifier)."""
    B, H = cls_tok.shape
    N = cls_w_pad.shape[1]
    out = pl.pallas_call(
        _head_kernel,
        out_shape=jax.ShapeDtypeStruct((B, N), jnp.float32),
        grid=(1,),
        in_specs=[
            pl.BlockSpec((B, H), lambda i: (0, 0)),
            pl.BlockSpec((H, H), lambda i: (0, 0)),
            pl.BlockSpec((1, H), lambda i: (0, 0)),
            pl.BlockSpec((H, N), lambda i: (0, 0)),
            pl.BlockSpec((1, N), lambda i: (0, 0)),
        ],
        out_specs=pl.BlockSpec((B, N), lambda i: (0, 0)),
    )(cls_tok, pool_w, pool_b.reshape(1, H), cls_w_pad, cls_b_pad.reshape(1, N))
    return out[:, :NUM_CLASSES]


# ---------------------------------------------------------------------------
# Parameter init (deterministic, synthetic). Matmul weights stored in bf16,
# per-layer tensors stacked on a leading layer axis.
# ---------------------------------------------------------------------------
def init_params(key):
    def nrm(k, shape, scale=0.02, dtype=jnp.bfloat16):
        return (scale * jax.random.normal(k, shape, dtype=jnp.float32)).astype(dtype)

    ks = jax.random.split(key, 16)
    L, H, I = NUM_LAYERS, HIDDEN, INTERMEDIATE

    cls_w = nrm(ks[0], (H, NUM_CLASSES))
    cls_w_pad = jnp.zeros((H, CLS_PAD), jnp.bfloat16).at[:, :NUM_CLASSES].set(cls_w)

    return {
        "word_emb": nrm(ks[1], (VOCAB, H), dtype=jnp.float32),
        "pos_emb": nrm(ks[2], (MAX_POS, H), dtype=jnp.float32),
        "type_emb": nrm(ks[3], (TYPE_VOCAB, H), dtype=jnp.float32),
        "emb_ln_g": jnp.ones((H,), jnp.float32),
        "emb_ln_b": jnp.zeros((H,), jnp.float32),
        "pool_w": nrm(ks[4], (H, H)),
        "pool_b": jnp.zeros((H,), jnp.float32),
        "cls_w_pad": cls_w_pad,
        "cls_b_pad": jnp.zeros((CLS_PAD,), jnp.float32),
        # stacked per-layer tensors
        "qkv_w": nrm(ks[5], (L, H, 3 * H)),
        "qkv_b": jnp.zeros((L, 1, 3 * H), jnp.float32),
        "o_w": nrm(ks[6], (L, H, H)),
        "o_b": jnp.zeros((L, 1, H), jnp.float32),
        "ln1_g": jnp.ones((L, 1, H), jnp.float32),
        "ln1_b": jnp.zeros((L, 1, H), jnp.float32),
        "i_w": nrm(ks[7], (L, H, I)),
        "i_b": jnp.zeros((L, 1, I), jnp.float32),
        "f_w": nrm(ks[8], (L, I, H)),
        "f_b": jnp.zeros((L, 1, H), jnp.float32),
        "ln2_g": jnp.ones((L, 1, H), jnp.float32),
        "ln2_b": jnp.zeros((L, 1, H), jnp.float32),
    }


# ---------------------------------------------------------------------------
# Forward pass (mirrors RoBERTaClass.forward, inference mode)
# ---------------------------------------------------------------------------
def roberta_class_forward(params, input_ids, attention_mask, token_type_ids):
    B, S = input_ids.shape
    mask_f = attention_mask.astype(jnp.float32)

    # RoBERTa-style position ids: cumulative over non-pad tokens, offset by pad idx.
    pos_ids = (jnp.cumsum(attention_mask, axis=1) * attention_mask + PAD_IDX).astype(jnp.int32)

    # --- embedding gathers (glue); LayerNorm happens inside the encoder kernel at l==0 ---
    emb = (params["word_emb"][input_ids]
           + params["pos_emb"][pos_ids]
           + params["type_emb"][token_type_ids])                       # (B, S, H)
    emb2d = emb.reshape(B * S, HIDDEN)

    # additive key mask kept at (B, 1, S); replicated across heads/rows via index_map only.
    add_mask = ((1.0 - mask_f) * -1e9).reshape(B, 1, S)

    # --- full encoder stack: ONE pallas_call, grid=(B, NUM_LAYERS) ---
    x = roberta_encoder(emb2d, add_mask, params, B, S)                 # (B*S, H) f32

    # --- pooler (tanh dense on <s>/CLS) + Dropout(0.3, identity) + Linear(H,2), fused ---
    cls_tok = x[::S]                                                   # (B, H) CLS rows
    logits = pooler_classifier(cls_tok, params["pool_w"], params["pool_b"],
                               params["cls_w_pad"], params["cls_b_pad"])
    return logits                                                      # (B, 2)


# ---------------------------------------------------------------------------
if __name__ == "__main__":
    B, S = 2, 8
    key = jax.random.PRNGKey(0)
    k_par, k_ids = jax.random.split(key)

    params = init_params(k_par)

    input_ids = jax.random.randint(k_ids, (B, S), 3, VOCAB, dtype=jnp.int32)
    attention_mask = jnp.ones((B, S), jnp.int32).at[1, S - 2:].set(0)   # pad tail of row 1
    input_ids = jnp.where(attention_mask == 0, PAD_IDX, input_ids)
    token_type_ids = jnp.zeros((B, S), jnp.int32)

    fwd = jax.jit(roberta_class_forward)
    logits = fwd(params, input_ids, attention_mask, token_type_ids)
    logits = jax.block_until_ready(logits)

    assert logits.shape == (B, NUM_CLASSES)
    assert bool(jnp.all(jnp.isfinite(logits)))
    print("KERNEL_OK")
</pallas_src>

<mosaic_0001>
module attributes {stable_mosaic.version = 11 : i64} {
  func.func @_head_kernel(%arg0: i32, %arg1: memref<2x128xf32, #tpu.memory_space<vmem>>, %arg2: memref<128x128xbf16, #tpu.memory_space<vmem>>, %arg3: memref<1x128xf32, #tpu.memory_space<vmem>>, %arg4: memref<128x128xbf16, #tpu.memory_space<vmem>>, %arg5: memref<1x128xf32, #tpu.memory_space<vmem>>, %arg6: memref<2x128xf32, #tpu.memory_space<vmem>>) attributes {dimension_semantics = [#tpu.dimension_semantics<arbitrary>], iteration_bounds = array<i64: 1>, scalar_prefetch = 0 : i64, scratch_operands = 0 : i64, tpu.core_type = #tpu.core_type<tc>, window_params = [{pipeline_mode = #tpu.pipeline_mode<synchronous>, transform_indices = @transform_0, window_bounds = array<i64: 2, 128>}, {pipeline_mode = #tpu.pipeline_mode<synchronous>, transform_indices = @transform_1, window_bounds = array<i64: 128, 128>}, {pipeline_mode = #tpu.pipeline_mode<synchronous>, transform_indices = @transform_2, window_bounds = array<i64: 1, 128>}, {pipeline_mode = #tpu.pipeline_mode<synchronous>, transform_indices = @transform_3, window_bounds = array<i64: 128, 128>}, {pipeline_mode = #tpu.pipeline_mode<synchronous>, transform_indices = @transform_4, window_bounds = array<i64: 1, 128>}, {pipeline_mode = #tpu.pipeline_mode<synchronous>, transform_indices = @transform_5, window_bounds = array<i64: 2, 128>}]} {
    %c0 = arith.constant 0 : index
    %c0_0 = arith.constant 0 : index
    %0 = vector.load %arg1[%c0, %c0_0] : memref<2x128xf32, #tpu.memory_space<vmem>>, vector<2x128xf32>
    %1 = arith.truncf %0 : vector<2x128xf32> to vector<2x128xbf16>
    %c0_1 = arith.constant 0 : index
    %c0_2 = arith.constant 0 : index
    %2 = vector.load %arg2[%c0_1, %c0_2] : memref<128x128xbf16, #tpu.memory_space<vmem>>, vector<128x128xbf16>
    %cst = arith.constant dense<0.000000e+00> : vector<2x128xf32>
    %3 = tpu.matmul %1, %2, %cst {dimension_numbers = #tpu.dot_dimension_numbers<[1], [0], [0], [1], [0, 0, 1, 1], [], []>} : vector<2x128xbf16>, vector<128x128xbf16>, vector<2x128xf32> -> vector<2x128xf32>
    %c0_3 = arith.constant 0 : index
    %c0_4 = arith.constant 0 : index
    %4 = vector.load %arg3[%c0_3, %c0_4] : memref<1x128xf32, #tpu.memory_space<vmem>>, vector<1x128xf32>
    %5 = vector.broadcast %4 : vector<1x128xf32> to vector<2x128xf32>
    %6 = arith.addf %3, %5 : vector<2x128xf32>
    %7 = math.tanh %6 : vector<2x128xf32>
    %8 = arith.truncf %7 : vector<2x128xf32> to vector<2x128xbf16>
    %c0_5 = arith.constant 0 : index
    %c0_6 = arith.constant 0 : index
    %9 = vector.load %arg4[%c0_5, %c0_6] : memref<128x128xbf16, #tpu.memory_space<vmem>>, vector<128x128xbf16>
    %cst_7 = arith.constant dense<0.000000e+00> : vector<2x128xf32>
    %10 = tpu.matmul %8, %9, %cst_7 {dimension_numbers = #tpu.dot_dimension_numbers<[1], [0], [0], [1], [0, 0, 1, 1], [], []>} : vector<2x128xbf16>, vector<128x128xbf16>, vector<2x128xf32> -> vector<2x128xf32>
    %c0_8 = arith.constant 0 : index
    %c0_9 = arith.constant 0 : index
    %11 = vector.load %arg5[%c0_8, %c0_9] : memref<1x128xf32, #tpu.memory_space<vmem>>, vector<1x128xf32>
    %12 = vector.broadcast %11 : vector<1x128xf32> to vector<2x128xf32>
    %13 = arith.addf %10, %12 : vector<2x128xf32>
    %c0_10 = arith.constant 0 : index
    %c0_11 = arith.constant 0 : index
    %14 = vector.load %arg6[%c0_10, %c0_11] : memref<2x128xf32, #tpu.memory_space<vmem>>, vector<2x128xf32>
    tpu.vector_store %arg6[%c0_10, %c0_11], %13 {strides = array<i32>} : memref<2x128xf32, #tpu.memory_space<vmem>>, vector<2x128xf32>,
    return
  }
  func.func @transform_0(%arg0: i32) -> (i32, i32) {
    %c0_i32 = arith.constant 0 : i32
    %c0_i32_0 = arith.constant 0 : i32
    %c0_i32_1 = arith.constant 0 : i32
    return %c0_i32, %c0_i32_0 : i32, i32
  }
  func.func @transform_1(%arg0: i32) -> (i32, i32) {
    %c0_i32 = arith.constant 0 : i32
    %c0_i32_0 = arith.constant 0 : i32
    %c0_i32_1 = arith.constant 0 : i32
    return %c0_i32, %c0_i32_0 : i32, i32
  }
  func.func @transform_2(%arg0: i32) -> (i32, i32) {
    %c0_i32 = arith.constant 0 : i32
    %c0_i32_0 = arith.constant 0 : i32
    %c0_i32_1 = arith.constant 0 : i32
    return %c0_i32, %c0_i32_0 : i32, i32
  }
  func.func @transform_3(%arg0: i32) -> (i32, i32) {
    %c0_i32 = arith.constant 0 : i32
    %c0_i32_0 = arith.constant 0 : i32
    %c0_i32_1 = arith.constant 0 : i32
    return %c0_i32, %c0_i32_0 : i32, i32
  }
  func.func @transform_4(%arg0: i32) -> (i32, i32) {
    %c0_i32 = arith.constant 0 : i32
    %c0_i32_0 = arith.constant 0 : i32
    %c0_i32_1 = arith.constant 0 : i32
    return %c0_i32, %c0_i32_0 : i32, i32
  }
  func.func @transform_5(%arg0: i32) -> (i32, i32) {
    %c0_i32 = arith.constant 0 : i32
    %c0_i32_0 = arith.constant 0 : i32
    %c0_i32_1 = arith.constant 0 : i32
    return %c0_i32, %c0_i32_0 : i32, i32
  }
}

module attributes {stable_mosaic.version = 11 : i64} {
  func.func @_encoder_kernel(%arg0: i32, %arg1: i32, %arg2: memref<8x128xf32, #tpu.memory_space<vmem>>, %arg3: memref<1x1x8xf32, #tpu.memory_space<vmem>>, %arg4: memref<1x128xf32, #tpu.memory_space<vmem>>, %arg5: memref<1x128xf32, #tpu.memory_space<vmem>>, %arg6: memref<1x128x384xbf16, #tpu.memory_space<vmem>>, %arg7: memref<1x1x384xf32, #tpu.memory_space<vmem>>, %arg8: memref<1x128x128xbf16, #tpu.memory_space<vmem>>, %arg9: memref<1x1x128xf32, #tpu.memory_space<vmem>>, %arg10: memref<1x1x128xf32, #tpu.memory_space<vmem>>, %arg11: memref<1x1x128xf32, #tpu.memory_space<vmem>>, %arg12: memref<1x128x256xbf16, #tpu.memory_space<vmem>>, %arg13: memref<1x1x256xf32, #tpu.memory_space<vmem>>, %arg14: memref<1x256x128xbf16, #tpu.memory_space<vmem>>, %arg15: memref<1x1x128xf32, #tpu.memory_space<vmem>>, %arg16: memref<1x1x128xf32, #tpu.memory_space<vmem>>, %arg17: memref<1x1x128xf32, #tpu.memory_space<vmem>>, %arg18: memref<8x128xf32, #tpu.memory_space<vmem>>) attributes {dimension_semantics = [#tpu.dimension_semantics<parallel>, #tpu.dimension_semantics<arbitrary>], iteration_bounds = array<i64: 2, 2>, scalar_prefetch = 0 : i64, scratch_operands = 0 : i64, tpu.core_type = #tpu.core_type<tc>, window_params = [{transform_indices = @transform_0, window_bounds = array<i64: 8, 128>}, {transform_indices = @transform_1, window_bounds = array<i64: 1, 1, 8>}, {pipeline_mode = #tpu.pipeline_mode<synchronous>, transform_indices = @transform_2, window_bounds = array<i64: 1, 128>}, {pipeline_mode = #tpu.pipeline_mode<synchronous>, transform_indices = @transform_3, window_bounds = array<i64: 1, 128>}, {transform_indices = @transform_4, window_bounds = array<i64: 1, 128, 384>}, {transform_indices = @transform_5, window_bounds = array<i64: 1, 1, 384>}, {transform_indices = @transform_6, window_bounds = array<i64: 1, 128, 128>}, {transform_indices = @transform_7, window_bounds = array<i64: 1, 1, 128>}, {transform_indices = @transform_8, window_bounds = array<i64: 1, 1, 128>}, {transform_indices = @transform_9, window_bounds = array<i64: 1, 1, 128>}, {transform_indices = @transform_10, window_bounds = array<i64: 1, 128, 256>}, {transform_indices = @transform_11, window_bounds = array<i64: 1, 1, 256>}, {transform_indices = @transform_12, window_bounds = array<i64: 1, 256, 128>}, {transform_indices = @transform_13, window_bounds = array<i64: 1, 1, 128>}, {transform_indices = @transform_14, window_bounds = array<i64: 1, 1, 128>}, {transform_indices = @transform_15, window_bounds = array<i64: 1, 1, 128>}, {transform_indices = @transform_16, window_bounds = array<i64: 8, 128>}]} {
    %c0_i32 = arith.constant 0 : i32
    %0 = arith.cmpi eq, %arg1, %c0_i32 : i32
    %1 = arith.extui %0 : i1 to i32
    %c0_i32_0 = arith.constant 0 : i32
    %2 = arith.cmpi ne, %1, %c0_i32_0 : i32
    scf.if %2 {
      %c0_71 = arith.constant 0 : index
      %c0_72 = arith.constant 0 : index
      %148 = vector.load %arg2[%c0_71, %c0_72] : memref<8x128xf32, #tpu.memory_space<vmem>>, vector<8x128xf32>
      %c0_73 = arith.constant 0 : index
      %c0_74 = arith.constant 0 : index
      %149 = vector.load %arg4[%c0_73, %c0_74] : memref<1x128xf32, #tpu.memory_space<vmem>>, vector<1x128xf32>
      %c0_75 = arith.constant 0 : index
      %c0_76 = arith.constant 0 : index
      %150 = vector.load %arg5[%c0_75, %c0_76] : memref<1x128xf32, #tpu.memory_space<vmem>>, vector<1x128xf32>
      %cst_77 = arith.constant dense<0.000000e+00> : vector<8xf32>
      %151 = vector.multi_reduction <add>, %148, %cst_77 [1] : vector<8x128xf32> to vector<8xf32>
      %152 = vector.shape_cast %151 : vector<8xf32> to vector<8x1xf32>
      %cst_78 = arith.constant 1.280000e+02 : f32
      %153 = vector.broadcast %cst_78 : f32 to vector<8x1xf32>
      %154 = arith.divf %152, %153 : vector<8x1xf32>
      %155 = vector.broadcast %154 : vector<8x1xf32> to vector<8x128xf32>
      %156 = arith.subf %148, %155 : vector<8x128xf32>
      %157 = arith.mulf %156, %156 : vector<8x128xf32>
      %cst_79 = arith.constant dense<0.000000e+00> : vector<8xf32>
      %158 = vector.multi_reduction <add>, %157, %cst_79 [1] : vector<8x128xf32> to vector<8xf32>
      %159 = vector.shape_cast %158 : vector<8xf32> to vector<8x1xf32>
      %cst_80 = arith.constant 1.280000e+02 : f32
      %160 = vector.broadcast %cst_80 : f32 to vector<8x1xf32>
      %161 = arith.divf %159, %160 : vector<8x1xf32>
      %cst_81 = arith.constant 9.99999974E-6 : f32
      %162 = vector.broadcast %cst_81 : f32 to vector<8x1xf32>
      %163 = arith.addf %161, %162 : vector<8x1xf32>
      %164 = math.rsqrt %163 : vector<8x1xf32>
      %165 = vector.broadcast %164 : vector<8x1xf32> to vector<8x128xf32>
      %166 = arith.mulf %156, %165 : vector<8x128xf32>
      %167 = vector.broadcast %149 : vector<1x128xf32> to vector<8x128xf32>
      %168 = arith.mulf %166, %167 : vector<8x128xf32>
      %169 = vector.broadcast %150 : vector<1x128xf32> to vector<8x128xf32>
      %170 = arith.addf %168, %169 : vector<8x128xf32>
      %c0_82 = arith.constant 0 : index
      %c0_83 = arith.constant 0 : index
      %171 = vector.load %arg18[%c0_82, %c0_83] : memref<8x128xf32, #tpu.memory_space<vmem>>, vector<8x128xf32>
      tpu.vector_store %arg18[%c0_82, %c0_83], %170 {strides = array<i32>} : memref<8x128xf32, #tpu.memory_space<vmem>>, vector<8x128xf32>,
    } else {
    }
    %c0 = arith.constant 0 : index
    %c0_1 = arith.constant 0 : index
    %3 = vector.load %arg18[%c0, %c0_1] : memref<8x128xf32, #tpu.memory_space<vmem>>, vector<8x128xf32>
    %4 = arith.truncf %3 : vector<8x128xf32> to vector<8x128xbf16>
    %c0_2 = arith.constant 0 : index
    %c0_3 = arith.constant 0 : index
    %c0_4 = arith.constant 0 : index
    %5 = vector.load %arg6[%c0_2, %c0_3, %c0_4] : memref<1x128x384xbf16, #tpu.memory_space<vmem>>, vector<1x128x384xbf16>
    %6 = vector.shape_cast %5 : vector<1x128x384xbf16> to vector<128x384xbf16>
    %cst = arith.constant dense<0.000000e+00> : vector<8x384xf32>
    %7 = tpu.matmul %4, %6, %cst {dimension_numbers = #tpu.dot_dimension_numbers<[1], [0], [0], [1], [0, 0, 1, 1], [], []>} : vector<8x128xbf16>, vector<128x384xbf16>, vector<8x384xf32> -> vector<8x384xf32>
    %c0_5 = arith.constant 0 : index
    %c0_6 = arith.constant 0 : index
    %c0_7 = arith.constant 0 : index
    %8 = vector.load %arg7[%c0_5, %c0_6, %c0_7] : memref<1x1x384xf32, #tpu.memory_space<vmem>>, vector<1x1x384xf32>
    %9 = vector.shape_cast %8 : vector<1x1x384xf32> to vector<1x384xf32>
    %10 = vector.broadcast %9 : vector<1x384xf32> to vector<8x384xf32>
    %11 = arith.addf %7, %10 : vector<8x384xf32>
    %12 = arith.truncf %11 : vector<8x384xf32> to vector<8x384xbf16>
    %c0_8 = arith.constant 0 : index
    %c0_9 = arith.constant 0 : index
    %c0_10 = arith.constant 0 : index
    %13 = vector.load %arg3[%c0_8, %c0_9, %c0_10] : memref<1x1x8xf32, #tpu.memory_space<vmem>>, vector<1x1x8xf32>
    %14 = vector.shape_cast %13 : vector<1x1x8xf32> to vector<1x8xf32>
    %c0_11 = arith.constant 0 : index
    %c0_12 = arith.constant 0 : index
    %c0_13 = arith.constant 0 : index
    %15 = vector.load %arg8[%c0_11, %c0_12, %c0_13] : memref<1x128x128xbf16, #tpu.memory_space<vmem>>, vector<1x128x128xbf16>
    %16 = vector.shape_cast %15 : vector<1x128x128xbf16> to vector<128x128xbf16>
    %c0_14 = arith.constant 0 : index
    %c0_15 = arith.constant 0 : index
    %c0_16 = arith.constant 0 : index
    %17 = vector.load %arg9[%c0_14, %c0_15, %c0_16] : memref<1x1x128xf32, #tpu.memory_space<vmem>>, vector<1x1x128xf32>
    %18 = vector.shape_cast %17 : vector<1x1x128xf32> to vector<1x128xf32>
    %19 = vector.extract_strided_slice %12 {offsets = [0, 0], sizes = [8, 64], strides = [1, 1]} : vector<8x384xbf16> to vector<8x64xbf16>
    %20 = vector.extract_strided_slice %12 {offsets = [0, 128], sizes = [8, 64], strides = [1, 1]} : vector<8x384xbf16> to vector<8x64xbf16>
    %21 = vector.extract_strided_slice %12 {offsets = [0, 256], sizes = [8, 64], strides = [1, 1]} : vector<8x384xbf16> to vector<8x64xbf16>
    %cst_17 = arith.constant dense<0.000000e+00> : vector<8x8xf32>
    %22 = tpu.matmul %19, %20, %cst_17 {dimension_numbers = #tpu.dot_dimension_numbers<[1], [1], [0], [0], [0, 0, 1, 0], [], []>} : vector<8x64xbf16>, vector<8x64xbf16>, vector<8x8xf32> -> vector<8x8xf32>
    %cst_18 = arith.constant 1.250000e-01 : f32
    %23 = vector.broadcast %cst_18 : f32 to vector<8x8xf32>
    %24 = arith.mulf %22, %23 : vector<8x8xf32>
    %25 = vector.broadcast %14 : vector<1x8xf32> to vector<8x8xf32>
    %26 = arith.addf %24, %25 : vector<8x8xf32>
    %cst_19 = arith.constant dense<0xFF800000> : vector<8xf32>
    %27 = vector.multi_reduction <maximumf>, %26, %cst_19 [1] : vector<8x8xf32> to vector<8xf32>
    %28 = vector.shape_cast %27 : vector<8xf32> to vector<8x1xf32>
    %29 = vector.broadcast %28 : vector<8x1xf32> to vector<8x8xf32>
    %30 = arith.subf %26, %29 : vector<8x8xf32>
    %31 = math.exp %30 : vector<8x8xf32>
    %cst_20 = arith.constant dense<0.000000e+00> : vector<8xf32>
    %32 = vector.multi_reduction <add>, %31, %cst_20 [1] : vector<8x8xf32> to vector<8xf32>
    %33 = vector.shape_cast %32 : vector<8xf32> to vector<8x1xf32>
    %34 = tpu.reciprocal %33 {approx = true} : vector<8x1xf32> -> vector<8x1xf32>
    %35 = vector.broadcast %34 : vector<8x1xf32> to vector<8x8xf32>
    %36 = arith.mulf %31, %35 : vector<8x8xf32>
    %37 = arith.truncf %36 : vector<8x8xf32> to vector<8x8xbf16>
    %cst_21 = arith.constant dense<0.000000e+00> : vector<8x64xf32>
    %38 = tpu.matmul %37, %21, %cst_21 {dimension_numbers = #tpu.dot_dimension_numbers<[1], [0], [0], [1], [0, 0, 1, 1], [], []>} : vector<8x8xbf16>, vector<8x64xbf16>, vector<8x64xf32> -> vector<8x64xf32>
    %39 = arith.truncf %38 : vector<8x64xf32> to vector<8x64xbf16>
    %40 = vector.extract_strided_slice %16 {offsets = [0, 0], sizes = [64, 128], strides = [1, 1]} : vector<128x128xbf16> to vector<64x128xbf16>
    %cst_22 = arith.constant dense<0.000000e+00> : vector<8x128xf32>
    %41 = tpu.matmul %39, %40, %cst_22 {dimension_numbers = #tpu.dot_dimension_numbers<[1], [0], [0], [1], [0, 0, 1, 1], [], []>} : vector<8x64xbf16>, vector<64x128xbf16>, vector<8x128xf32> -> vector<8x128xf32>
    %42 = vector.broadcast %18 : vector<1x128xf32> to vector<8x128xf32>
    %43 = arith.addf %42, %41 : vector<8x128xf32>
    %44 = vector.extract_strided_slice %12 {offsets = [0, 64], sizes = [8, 64], strides = [1, 1]} : vector<8x384xbf16> to vector<8x64xbf16>
    %45 = vector.extract_strided_slice %12 {offsets = [0, 192], sizes = [8, 64], strides = [1, 1]} : vector<8x384xbf16> to vector<8x64xbf16>
    %46 = vector.extract_strided_slice %12 {offsets = [0, 320], sizes = [8, 64], strides = [1, 1]} : vector<8x384xbf16> to vector<8x64xbf16>
    %cst_23 = arith.constant dense<0.000000e+00> : vector<8x8xf32>
    %47 = tpu.matmul %44, %45, %cst_23 {dimension_numbers = #tpu.dot_dimension_numbers<[1], [1], [0], [0], [0, 0, 1, 0], [], []>} : vector<8x64xbf16>, vector<8x64xbf16>, vector<8x8xf32> -> vector<8x8xf32>
    %cst_24 = arith.constant 1.250000e-01 : f32
    %48 = vector.broadcast %cst_24 : f32 to vector<8x8xf32>
    %49 = arith.mulf %47, %48 : vector<8x8xf32>
    %50 = vector.broadcast %14 : vector<1x8xf32> to vector<8x8xf32>
    %51 = arith.addf %49, %50 : vector<8x8xf32>
    %cst_25 = arith.constant dense<0xFF800000> : vector<8xf32>
    %52 = vector.multi_reduction <maximumf>, %51, %cst_25 [1] : vector<8x8xf32> to vector<8xf32>
    %53 = vector.shape_cast %52 : vector<8xf32> to vector<8x1xf32>
    %54 = vector.broadcast %53 : vector<8x1xf32> to vector<8x8xf32>
    %55 = arith.subf %51, %54 : vector<8x8xf32>
    %56 = math.exp %55 : vector<8x8xf32>
    %cst_26 = arith.constant dense<0.000000e+00> : vector<8xf32>
    %57 = vector.multi_reduction <add>, %56, %cst_26 [1] : vector<8x8xf32> to vector<8xf32>
    %58 = vector.shape_cast %57 : vector<8xf32> to vector<8x1xf32>
    %59 = tpu.reciprocal %58 {approx = true} : vector<8x1xf32> -> vector<8x1xf32>
    %60 = vector.broadcast %59 : vector<8x1xf32> to vector<8x8xf32>
    %61 = arith.mulf %56, %60 : vector<8x8xf32>
    %62 = arith.truncf %61 : vector<8x8xf32> to vector<8x8xbf16>
    %cst_27 = arith.constant dense<0.000000e+00> : vector<8x64xf32>
    %63 = tpu.matmul %62, %46, %cst_27 {dimension_numbers = #tpu.dot_dimension_numbers<[1], [0], [0], [1], [0, 0, 1, 1], [], []>} : vector<8x8xbf16>, vector<8x64xbf16>, vector<8x64xf32> -> vector<8x64xf32>
    %64 = arith.truncf %63 : vector<8x64xf32> to vector<8x64xbf16>
    %65 = vector.extract_strided_slice %16 {offsets = [64, 0], sizes = [64, 128], strides = [1, 1]} : vector<128x128xbf16> to vector<64x128xbf16>
    %cst_28 = arith.constant dense<0.000000e+00> : vector<8x128xf32>
    %66 = tpu.matmul %64, %65, %cst_28 {dimension_numbers = #tpu.dot_dimension_numbers<[1], [0], [0], [1], [0, 0, 1, 1], [], []>} : vector<8x64xbf16>, vector<64x128xbf16>, vector<8x128xf32> -> vector<8x128xf32>
    %67 = arith.addf %43, %66 : vector<8x128xf32>
    %68 = arith.addf %67, %3 : vector<8x128xf32>
    %c0_29 = arith.constant 0 : index
    %c0_30 = arith.constant 0 : index
    %c0_31 = arith.constant 0 : index
    %69 = vector.load %arg10[%c0_29, %c0_30, %c0_31] : memref<1x1x128xf32, #tpu.memory_space<vmem>>, vector<1x1x128xf32>
    %70 = vector.shape_cast %69 : vector<1x1x128xf32> to vector<1x128xf32>
    %c0_32 = arith.constant 0 : index
    %c0_33 = arith.constant 0 : index
    %c0_34 = arith.constant 0 : index
    %71 = vector.load %arg11[%c0_32, %c0_33, %c0_34] : memref<1x1x128xf32, #tpu.memory_space<vmem>>, vector<1x1x128xf32>
    %72 = vector.shape_cast %71 : vector<1x1x128xf32> to vector<1x128xf32>
    %cst_35 = arith.constant dense<0.000000e+00> : vector<8xf32>
    %73 = vector.multi_reduction <add>, %68, %cst_35 [1] : vector<8x128xf32> to vector<8xf32>
    %74 = vector.shape_cast %73 : vector<8xf32> to vector<8x1xf32>
    %cst_36 = arith.constant 1.280000e+02 : f32
    %75 = vector.broadcast %cst_36 : f32 to vector<8x1xf32>
    %76 = arith.divf %74, %75 : vector<8x1xf32>
    %77 = vector.broadcast %76 : vector<8x1xf32> to vector<8x128xf32>
    %78 = arith.subf %68, %77 : vector<8x128xf32>
    %79 = arith.mulf %78, %78 : vector<8x128xf32>
    %cst_37 = arith.constant dense<0.000000e+00> : vector<8xf32>
    %80 = vector.multi_reduction <add>, %79, %cst_37 [1] : vector<8x128xf32> to vector<8xf32>
    %81 = vector.shape_cast %80 : vector<8xf32> to vector<8x1xf32>
    %cst_38 = arith.constant 1.280000e+02 : f32
    %82 = vector.broadcast %cst_38 : f32 to vector<8x1xf32>
    %83 = arith.divf %81, %82 : vector<8x1xf32>
    %cst_39 = arith.constant 9.99999974E-6 : f32
    %84 = vector.broadcast %cst_39 : f32 to vector<8x1xf32>
    %85 = arith.addf %83, %84 : vector<8x1xf32>
    %86 = math.rsqrt %85 : vector<8x1xf32>
    %87 = vector.broadcast %86 : vector<8x1xf32> to vector<8x128xf32>
    %88 = arith.mulf %78, %87 : vector<8x128xf32>
    %89 = vector.broadcast %70 : vector<1x128xf32> to vector<8x128xf32>
    %90 = arith.mulf %88, %89 : vector<8x128xf32>
    %91 = vector.broadcast %72 : vector<1x128xf32> to vector<8x128xf32>
    %92 = arith.addf %90, %91 : vector<8x128xf32>
    %93 = arith.truncf %92 : vector<8x128xf32> to vector<8x128xbf16>
    %c0_40 = arith.constant 0 : index
    %c0_41 = arith.constant 0 : index
    %c0_42 = arith.constant 0 : index
    %94 = vector.load %arg12[%c0_40, %c0_41, %c0_42] : memref<1x128x256xbf16, #tpu.memory_space<vmem>>, vector<1x128x256xbf16>
    %95 = vector.shape_cast %94 : vector<1x128x256xbf16> to vector<128x256xbf16>
    %cst_43 = arith.constant dense<0.000000e+00> : vector<8x256xf32>
    %96 = tpu.matmul %93, %95, %cst_43 {dimension_numbers = #tpu.dot_dimension_numbers<[1], [0], [0], [1], [0, 0, 1, 1], [], []>} : vector<8x128xbf16>, vector<128x256xbf16>, vector<8x256xf32> -> vector<8x256xf32>
    %c0_44 = arith.constant 0 : index
    %c0_45 = arith.constant 0 : index
    %c0_46 = arith.constant 0 : index
    %97 = vector.load %arg13[%c0_44, %c0_45, %c0_46] : memref<1x1x256xf32, #tpu.memory_space<vmem>>, vector<1x1x256xf32>
    %98 = vector.shape_cast %97 : vector<1x1x256xf32> to vector<1x256xf32>
    %99 = vector.broadcast %98 : vector<1x256xf32> to vector<8x256xf32>
    %100 = arith.addf %96, %99 : vector<8x256xf32>
    %101 = arith.mulf %100, %100 : vector<8x256xf32>
    %102 = arith.mulf %100, %101 : vector<8x256xf32>
    %cst_47 = arith.constant 4.471500e-02 : f32
    %103 = vector.broadcast %cst_47 : f32 to vector<8x256xf32>
    %104 = arith.mulf %103, %102 : vector<8x256xf32>
    %105 = arith.addf %100, %104 : vector<8x256xf32>
    %cst_48 = arith.constant 0.797884583 : f32
    %106 = vector.broadcast %cst_48 : f32 to vector<8x256xf32>
    %107 = arith.mulf %106, %105 : vector<8x256xf32>
    %108 = math.tanh %107 : vector<8x256xf32>
    %cst_49 = arith.constant 1.000000e+00 : f32
    %109 = vector.broadcast %cst_49 : f32 to vector<8x256xf32>
    %110 = arith.addf %109, %108 : vector<8x256xf32>
    %cst_50 = arith.constant 5.000000e-01 : f32
    %111 = vector.broadcast %cst_50 : f32 to vector<8x256xf32>
    %112 = arith.mulf %111, %110 : vector<8x256xf32>
    %113 = arith.mulf %100, %112 : vector<8x256xf32>
    %114 = arith.truncf %113 : vector<8x256xf32> to vector<8x256xbf16>
    %c0_51 = arith.constant 0 : index
    %c0_52 = arith.constant 0 : index
    %c0_53 = arith.constant 0 : index
    %115 = vector.load %arg14[%c0_51, %c0_52, %c0_53] : memref<1x256x128xbf16, #tpu.memory_space<vmem>>, vector<1x256x128xbf16>
    %116 = vector.shape_cast %115 : vector<1x256x128xbf16> to vector<256x128xbf16>
    %cst_54 = arith.constant dense<0.000000e+00> : vector<8x128xf32>
    %117 = tpu.matmul %114, %116, %cst_54 {dimension_numbers = #tpu.dot_dimension_numbers<[1], [0], [0], [1], [0, 0, 1, 1], [], []>} : vector<8x256xbf16>, vector<256x128xbf16>, vector<8x128xf32> -> vector<8x128xf32>
    %c0_55 = arith.constant 0 : index
    %c0_56 = arith.constant 0 : index
    %c0_57 = arith.constant 0 : index
    %118 = vector.load %arg15[%c0_55, %c0_56, %c0_57] : memref<1x1x128xf32, #tpu.memory_space<vmem>>, vector<1x1x128xf32>
    %119 = vector.shape_cast %118 : vector<1x1x128xf32> to vector<1x128xf32>
    %120 = vector.broadcast %119 : vector<1x128xf32> to vector<8x128xf32>
    %121 = arith.addf %117, %120 : vector<8x128xf32>
    %122 = arith.addf %121, %92 : vector<8x128xf32>
    %c0_58 = arith.constant 0 : index
    %c0_59 = arith.constant 0 : index
    %c0_60 = arith.constant 0 : index
    %123 = vector.load %arg16[%c0_58, %c0_59, %c0_60] : memref<1x1x128xf32, #tpu.memory_space<vmem>>, vector<1x1x128xf32>
    %124 = vector.shape_cast %123 : vector<1x1x128xf32> to vector<1x128xf32>
    %c0_61 = arith.constant 0 : index
    %c0_62 = arith.constant 0 : index
    %c0_63 = arith.constant 0 : index
    %125 = vector.load %arg17[%c0_61, %c0_62, %c0_63] : memref<1x1x128xf32, #tpu.memory_space<vmem>>, vector<1x1x128xf32>
    %126 = vector.shape_cast %125 : vector<1x1x128xf32> to vector<1x128xf32>
    %cst_64 = arith.constant dense<0.000000e+00> : vector<8xf32>
    %127 = vector.multi_reduction <add>, %122, %cst_64 [1] : vector<8x128xf32> to vector<8xf32>
    %128 = vector.shape_cast %127 : vector<8xf32> to vector<8x1xf32>
    %cst_65 = arith.constant 1.280000e+02 : f32
    %129 = vector.broadcast %cst_65 : f32 to vector<8x1xf32>
    %130 = arith.divf %128, %129 : vector<8x1xf32>
    %131 = vector.broadcast %130 : vector<8x1xf32> to vector<8x128xf32>
    %132 = arith.subf %122, %131 : vector<8x128xf32>
    %133 = arith.mulf %132, %132 : vector<8x128xf32>
    %cst_66 = arith.constant dense<0.000000e+00> : vector<8xf32>
    %134 = vector.multi_reduction <add>, %133, %cst_66 [1] : vector<8x128xf32> to vector<8xf32>
    %135 = vector.shape_cast %134 : vector<8xf32> to vector<8x1xf32>
    %cst_67 = arith.constant 1.280000e+02 : f32
    %136 = vector.broadcast %cst_67 : f32 to vector<8x1xf32>
    %137 = arith.divf %135, %136 : vector<8x1xf32>
    %cst_68 = arith.constant 9.99999974E-6 : f32
    %138 = vector.broadcast %cst_68 : f32 to vector<8x1xf32>
    %139 = arith.addf %137, %138 : vector<8x1xf32>
    %140 = math.rsqrt %139 : vector<8x1xf32>
    %141 = vector.broadcast %140 : vector<8x1xf32> to vector<8x128xf32>
    %142 = arith.mulf %132, %141 : vector<8x128xf32>
    %143 = vector.broadcast %124 : vector<1x128xf32> to vector<8x128xf32>
    %144 = arith.mulf %142, %143 : vector<8x128xf32>
    %145 = vector.broadcast %126 : vector<1x128xf32> to vector<8x128xf32>
    %146 = arith.addf %144, %145 : vector<8x128xf32>
    %c0_69 = arith.constant 0 : index
    %c0_70 = arith.constant 0 : index
    %147 = vector.load %arg18[%c0_69, %c0_70] : memref<8x128xf32, #tpu.memory_space<vmem>>, vector<8x128xf32>
    tpu.vector_store %arg18[%c0_69, %c0_70], %146 {strides = array<i32>} : memref<8x128xf32, #tpu.memory_space<vmem>>, vector<8x128xf32>,
    return
  }
  func.func @transform_0(%arg0: i32, %arg1: i32) -> (i32, i32) {
    %c0_i32 = arith.constant 0 : i32
    %c0_i32_0 = arith.constant 0 : i32
    return %arg0, %c0_i32 : i32, i32
  }
  func.func @transform_1(%arg0: i32, %arg1: i32) -> (i32, i32, i32) {
    %c0_i32 = arith.constant 0 : i32
    %c0_i32_0 = arith.constant 0 : i32
    %c0_i32_1 = arith.constant 0 : i32
    return %arg0, %c0_i32, %c0_i32_0 : i32, i32, i32
  }
  func.func @transform_2(%arg0: i32, %arg1: i32) -> (i32, i32) {
    %c0_i32 = arith.constant 0 : i32
    %c0_i32_0 = arith.constant 0 : i32
    %c0_i32_1 = arith.constant 0 : i32
    return %c0_i32, %c0_i32_0 : i32, i32
  }
  func.func @transform_3(%arg0: i32, %arg1: i32) -> (i32, i32) {
    %c0_i32 = arith.constant 0 : i32
    %c0_i32_0 = arith.constant 0 : i32
    %c0_i32_1 = arith.constant 0 : i32
    return %c0_i32, %c0_i32_0 : i32, i32
  }
  func.func @transform_4(%arg0: i32, %arg1: i32) -> (i32, i32, i32) {
    %c0_i32 = arith.constant 0 : i32
    %c0_i32_0 = arith.constant 0 : i32
    %c0_i32_1 = arith.constant 0 : i32
    return %arg1, %c0_i32, %c0_i32_0 : i32, i32, i32
  }
  func.func @transform_5(%arg0: i32, %arg1: i32) -> (i32, i32, i32) {
    %c0_i32 = arith.constant 0 : i32
    %c0_i32_0 = arith.constant 0 : i32
    %c0_i32_1 = arith.constant 0 : i32
    return %arg1, %c0_i32, %c0_i32_0 : i32, i32, i32
  }
  func.func @transform_6(%arg0: i32, %arg1: i32) -> (i32, i32, i32) {
    %c0_i32 = arith.constant 0 : i32
    %c0_i32_0 = arith.constant 0 : i32
    %c0_i32_1 = arith.constant 0 : i32
    return %arg1, %c0_i32, %c0_i32_0 : i32, i32, i32
  }
  func.func @transform_7(%arg0: i32, %arg1: i32) -> (i32, i32, i32) {
    %c0_i32 = arith.constant 0 : i32
    %c0_i32_0 = arith.constant 0 : i32
    %c0_i32_1 = arith.constant 0 : i32
    return %arg1, %c0_i32, %c0_i32_0 : i32, i32, i32
  }
  func.func @transform_8(%arg0: i32, %arg1: i32) -> (i32, i32, i32) {
    %c0_i32 = arith.constant 0 : i32
    %c0_i32_0 = arith.constant 0 : i32
    %c0_i32_1 = arith.constant 0 : i32
    return %arg1, %c0_i32, %c0_i32_0 : i32, i32, i32
  }
  func.func @transform_9(%arg0: i32, %arg1: i32) -> (i32, i32, i32) {
    %c0_i32 = arith.constant 0 : i32
    %c0_i32_0 = arith.constant 0 : i32
    %c0_i32_1 = arith.constant 0 : i32
    return %arg1, %c0_i32, %c0_i32_0 : i32, i32, i32
  }
  func.func @transform_10(%arg0: i32, %arg1: i32) -> (i32, i32, i32) {
    %c0_i32 = arith.constant 0 : i32
    %c0_i32_0 = arith.constant 0 : i32
    %c0_i32_1 = arith.constant 0 : i32
    return %arg1, %c0_i32, %c0_i32_0 : i32, i32, i32
  }
  func.func @transform_11(%arg0: i32, %arg1: i32) -> (i32, i32, i32) {
    %c0_i32 = arith.constant 0 : i32
    %c0_i32_0 = arith.constant 0 : i32
    %c0_i32_1 = arith.constant 0 : i32
    return %arg1, %c0_i32, %c0_i32_0 : i32, i32, i32
  }
  func.func @transform_12(%arg0: i32, %arg1: i32) -> (i32, i32, i32) {
    %c0_i32 = arith.constant 0 : i32
    %c0_i32_0 = arith.constant 0 : i32
    %c0_i32_1 = arith.constant 0 : i32
    return %arg1, %c0_i32, %c0_i32_0 : i32, i32, i32
  }
  func.func @transform_13(%arg0: i32, %arg1: i32) -> (i32, i32, i32) {
    %c0_i32 = arith.constant 0 : i32
    %c0_i32_0 = arith.constant 0 : i32
    %c0_i32_1 = arith.constant 0 : i32
    return %arg1, %c0_i32, %c0_i32_0 : i32, i32, i32
  }
  func.func @transform_14(%arg0: i32, %arg1: i32) -> (i32, i32, i32) {
    %c0_i32 = arith.constant 0 : i32
    %c0_i32_0 = arith.constant 0 : i32
    %c0_i32_1 = arith.constant 0 : i32
    return %arg1, %c0_i32, %c0_i32_0 : i32, i32, i32
  }
  func.func @transform_15(%arg0: i32, %arg1: i32) -> (i32, i32, i32) {
    %c0_i32 = arith.constant 0 : i32
    %c0_i32_0 = arith.constant 0 : i32
    %c0_i32_1 = arith.constant 0 : i32
    return %arg1, %c0_i32, %c0_i32_0 : i32, i32, i32
  }
  func.func @transform_16(%arg0: i32, %arg1: i32) -> (i32, i32) {
    %c0_i32 = arith.constant 0 : i32
    %c0_i32_0 = arith.constant 0 : i32
    return %arg0, %c0_i32 : i32, i32
  }
}

</mosaic_0001>

<llo_original>
// kernel: roberta_class_forward.3
$region0: #{roberta_class_forward.3}
  #allocation0 [shape = 'u32[]', space=smem, size = 0x4, offset = 0x4, fixed_abs, tag = 'smem constant byte address 0x4 - core index']
  #allocation1 [shape = 'u32[144,128]{1,0:T(1,128)}', space=vmem, size = 0x12000, scoped, tag = 'internal scratch']
  %s0 = inlined_call_operand.vmem [shape: f32[2,128], index: 0, kind: input, shape index: {}]
  %s1 = inlined_call_operand.vmem [shape: bf16[128,128], index: 1, kind: input, shape index: {}]
  %s2 = inlined_call_operand.vmem [shape: f32[1,128], index: 2, kind: input, shape index: {}]
  %s3 = inlined_call_operand.vmem [shape: bf16[128,128], index: 3, kind: input, shape index: {}]
  %s4 = inlined_call_operand.vmem [shape: f32[1,128], index: 4, kind: input, shape index: {}]
  %s5 = inlined_call_operand.hbm [shape: f32[2,128], index: 5, kind: output, shape index: {}]
  %s6 = sld [smem:[#allocation0]]
  $region30: #{roberta_class_forward.3} parent=0
    _
  %s8 = ssub.s32 1, %s6
  %s9 = scalar_select 0, %s8, %s6
  $region1: #{roberta_class_forward.3} parent=0
    #allocation2 [shape = 'u8[1024]{0}', space=vmem, size = 0x400, scoped, tag = 'output window, operand 0, single buffered']
    #allocation3 [shape = 's32[1]{0}', space=sflag, size = 0x4, scoped, tag = 'scoped memory for roberta_class_forward.3']
    %10 = vsyncpa [#allocation3], 0
    // Predicated region
    $region2: #{roberta_class_forward.3} parent=1 // pred_check
      _
    $region3: #{roberta_class_forward.3} parent=1 // pred_check_branch
      %12 = sbr.rel (0) target = $region5
    $region4: #{roberta_class_forward.3} parent=1 // pred_region
      _
    $region5: #{roberta_class_forward.3} parent=1 // pred_fallthru
      _
    // Predicated region
    $region6: #{roberta_class_forward.3} parent=1 // pred_check
      _
    $region7: #{roberta_class_forward.3} parent=1 // pred_check_branch
      %14 = sbr.rel (0) target = $region9
    $region8: #{roberta_class_forward.3} parent=1 // pred_region
      _
    $region9: #{roberta_class_forward.3} parent=1 // pred_fallthru
      _
    // Predicated region
    $region10: #{roberta_class_forward.3} parent=1 // pred_check
      _
    $region11: #{roberta_class_forward.3} parent=1 // pred_check_branch
      %16 = sbr.rel (0) target = $region13
    $region12: #{roberta_class_forward.3} parent=1 // pred_region
      _
    $region13: #{roberta_class_forward.3} parent=1 // pred_fallthru
      _
    // Predicated region
    $region14: #{roberta_class_forward.3} parent=1 // pred_check
      _
    $region15: #{roberta_class_forward.3} parent=1 // pred_check_branch
      %18 = sbr.rel (0) target = $region17
    $region16: #{roberta_class_forward.3} parent=1 // pred_region
      _
    $region17: #{roberta_class_forward.3} parent=1 // pred_fallthru
      _
    // Predicated region
    $region18: #{roberta_class_forward.3} parent=1 // pred_check
      _
    $region19: #{roberta_class_forward.3} parent=1 // pred_check_branch
      %20 = sbr.rel (0) target = $region21
    $region20: #{roberta_class_forward.3} parent=1 // pred_region
      _
    $region21: #{roberta_class_forward.3} parent=1 // pred_fallthru
      _
    %v22 = vld [vmem:[%s0] sm:$0x3]
    %v23 = vpack.c.bf16 %v22, %v22
    %v24 = vld [vmem:[%s1] sm:$0xf]
    %v25 = vld [vmem:[%s1 + $0x4] sm:$0xf]
    %v26 = vld [vmem:[%s1 + $0x8] sm:$0xf]
    %v27 = vld [vmem:[%s1 + $0xc] sm:$0xf]
    %v28 = vld [vmem:[%s1 + $0x10] sm:$0xf]
    %v29 = vld [vmem:[%s1 + $0x14] sm:$0xf]
    %v30 = vld [vmem:[%s1 + $0x18] sm:$0xf]
    %v31 = vld [vmem:[%s1 + $0x1c] sm:$0xf]
    %v32 = vld [vmem:[%s1 + $0x20] sm:$0xf]
    %v33 = vld [vmem:[%s1 + $0x24] sm:$0xf]
    %v34 = vld [vmem:[%s1 + $0x28] sm:$0xf]
    %v35 = vld [vmem:[%s1 + $0x2c] sm:$0xf]
    %v36 = vld [vmem:[%s1 + $0x30] sm:$0xf]
    %v37 = vld [vmem:[%s1 + $0x34] sm:$0xf]
    %v38 = vld [vmem:[%s1 + $0x38] sm:$0xf]
    %v39 = vld [vmem:[%s1 + $0x3c] sm:$0xf]
    %v40 = vld [vmem:[%s2] sm:$0x1]
    %v42 = vlaneseq
    %v43 = vshrl.u32 %v42, 7
    %v44 = vsub.s32 0, %v43
    %v45 = vrot.slane %v40, %v44
    %v63 = vunpack.c.l.b16 %v24
    %v64 = vunpack.c.l.b16 %v25
    %v65 = vunpack.c.l.b16 %v26
    %v66 = vunpack.c.l.b16 %v27
    %v67 = vunpack.c.l.b16 %v28
    %v68 = vunpack.c.l.b16 %v29
    %v69 = vunpack.c.l.b16 %v30
    %v70 = vunpack.c.l.b16 %v31
    %v71 = vunpack.c.l.b16 %v32
    %v72 = vunpack.c.l.b16 %v33
    %v73 = vunpack.c.l.b16 %v34
    %v74 = vunpack.c.l.b16 %v35
    %v75 = vunpack.c.l.b16 %v36
    %v76 = vunpack.c.l.b16 %v37
    %v77 = vunpack.c.l.b16 %v38
    %v78 = vunpack.c.l.b16 %v39
    %v79 = vpack.c.b16 %v64, %v63
    %v80 = vpack.c.b16 %v66, %v65
    %v81 = vpack.c.b16 %v68, %v67
    %v82 = vpack.c.b16 %v70, %v69
    %v83 = vpack.c.b16 %v72, %v71
    %v84 = vpack.c.b16 %v74, %v73
    %v85 = vpack.c.b16 %v76, %v75
    %v86 = vpack.c.b16 %v78, %v77
    %95 = vmatprep.subr.bf16.mxu0 0
    %96 = vmatpush1.bf16.msra.mxu0 %v79
    %97 = vmatprep.subr.bf16.mxu0 0
    %98 = vmatpush1.bf16.msra.mxu0 %v80
    %99 = vmatprep.subr.bf16.mxu0 0
    %100 = vmatpush1.bf16.msra.mxu0 %v81
    %101 = vmatprep.subr.bf16.mxu0 0
    %102 = vmatpush1.bf16.msra.mxu0 %v82
    %103 = vmatprep.subr.bf16.mxu0 0
    %104 = vmatpush1.bf16.msra.mxu0 %v83
    %105 = vmatprep.subr.bf16.mxu0 0
    %106 = vmatpush1.bf16.msra.mxu0 %v84
    %107 = vmatprep.subr.bf16.mxu0 0
    %108 = vmatpush1.bf16.msra.mxu0 %v85
    %109 = vmatprep.subr.bf16.mxu0 0
    %110 = vmatpush1.bf16.msra.mxu0 %v86
    %111 = vmatprep.subr.bf16.mxu0 0
    %112 = vmatpush1.bf16.msra.mxu0 0
    %113 = vmatprep.subr.bf16.mxu0 0
    %114 = vmatpush1.bf16.msra.mxu0 0
    %115 = vmatprep.subr.bf16.mxu0 0
    %116 = vmatpush1.bf16.msra.mxu0 0
    %117 = vmatprep.subr.bf16.mxu0 0
    %118 = vmatpush1.bf16.msra.mxu0 0
    %119 = vmatprep.subr.bf16.mxu0 0
    %120 = vmatpush1.bf16.msra.mxu0 0
    %121 = vmatprep.subr.bf16.mxu0 0
    %122 = vmatpush1.bf16.msra.mxu0 0
    %123 = vmatprep.subr.bf16.mxu0 0
    %124 = vmatpush1.bf16.msra.mxu0 0
    %125 = vmatprep.subr.bf16.mxu0 0
    %126 = vmatpush1.bf16.msra.mxu0 0
    %127 = vmatprep.mubr.bf16.mxu0 0
    %128 = vmatmul.mubr.bf16.gmra.mrb[0].mxu0 %v23
    %v129 = vpop.f32.mrb[0].mxu0
    %v130 = vadd.f32 %v45, %v129
    %v131 = vpop.f32.mrb[0].mxu0
    %v132 = vpop.f32.mrb[0].mxu0
    %v133 = vpop.f32.mrb[0].mxu0
    %134 = vdwg.mxu0
    %v135 = vtanh.pop %v130
    %v136 = vpack.c.bf16 %v135, %v135
    %v137 = vld [vmem:[%s3] sm:$0xf]
    %v138 = vld [vmem:[%s3 + $0x4] sm:$0xf]
    %v139 = vld [vmem:[%s3 + $0x8] sm:$0xf]
    %v140 = vld [vmem:[%s3 + $0xc] sm:$0xf]
    %v141 = vld [vmem:[%s3 + $0x10] sm:$0xf]
    %v142 = vld [vmem:[%s3 + $0x14] sm:$0xf]
    %v143 = vld [vmem:[%s3 + $0x18] sm:$0xf]
    %v144 = vld [vmem:[%s3 + $0x1c] sm:$0xf]
    %v145 = vld [vmem:[%s3 + $0x20] sm:$0xf]
    %v146 = vld [vmem:[%s3 + $0x24] sm:$0xf]
    %v147 = vld [vmem:[%s3 + $0x28] sm:$0xf]
    %v148 = vld [vmem:[%s3 + $0x2c] sm:$0xf]
    %v149 = vld [vmem:[%s3 + $0x30] sm:$0xf]
    %v150 = vld [vmem:[%s3 + $0x34] sm:$0xf]
    %v151 = vld [vmem:[%s3 + $0x38] sm:$0xf]
    %v152 = vld [vmem:[%s3 + $0x3c] sm:$0xf]
    %v153 = vld [vmem:[%s4] sm:$0x1]
    %v155 = vlaneseq
    %v156 = vshrl.u32 %v155, 7
    %v157 = vsub.s32 0, %v156
    %v158 = vrot.slane %v153, %v157
    %v176 = vunpack.c.l.b16 %v137
    %v177 = vunpack.c.l.b16 %v138
    %v178 = vunpack.c.l.b16 %v139
    %v179 = vunpack.c.l.b16 %v140
    %v180 = vunpack.c.l.b16 %v141
    %v181 = vunpack.c.l.b16 %v142
    %v182 = vunpack.c.l.b16 %v143
    %v183 = vunpack.c.l.b16 %v144
    %v184 = vunpack.c.l.b16 %v145
    %v185 = vunpack.c.l.b16 %v146
    %v186 = vunpack.c.l.b16 %v147
    %v187 = vunpack.c.l.b16 %v148
    %v188 = vunpack.c.l.b16 %v149
    %v189 = vunpack.c.l.b16 %v150
    %v190 = vunpack.c.l.b16 %v151
    %v191 = vunpack.c.l.b16 %v152
    %v192 = vpack.c.b16 %v177, %v176
    %v193 = vpack.c.b16 %v179, %v178
    %v194 = vpack.c.b16 %v181, %v180
    %v195 = vpack.c.b16 %v183, %v182
    %v196 = vpack.c.b16 %v185, %v184
    %v197 = vpack.c.b16 %v187, %v186
    %v198 = vpack.c.b16 %v189, %v188
    %v199 = vpack.c.b16 %v191, %v190
    %208 = vmatprep.subr.bf16.mxu0 0
    %209 = vmatpush1.bf16.msra.mxu0 %v192
    %210 = vmatprep.subr.bf16.mxu0 0
    %211 = vmatpush1.bf16.msra.mxu0 %v193
    %212 = vmatprep.subr.bf16.mxu0 0
    %213 = vmatpush1.bf16.msra.mxu0 %v194
    %214 = vmatprep.subr.bf16.mxu0 0
    %215 = vmatpush1.bf16.msra.mxu0 %v195
    %216 = vmatprep.subr.bf16.mxu0 0
    %217 = vmatpush1.bf16.msra.mxu0 %v196
    %218 = vmatprep.subr.bf16.mxu0 0
    %219 = vmatpush1.bf16.msra.mxu0 %v197
    %220 = vmatprep.subr.bf16.mxu0 0
    %221 = vmatpush1.bf16.msra.mxu0 %v198
    %222 = vmatprep.subr.bf16.mxu0 0
    %223 = vmatpush1.bf16.msra.mxu0 %v199
    %224 = vmatprep.subr.bf16.mxu0 0
    %225 = vmatpush1.bf16.msra.mxu0 0
    %226 = vmatprep.subr.bf16.mxu0 0
    %227 = vmatpush1.bf16.msra.mxu0 0
    %228 = vmatprep.subr.bf16.mxu0 0
    %229 = vmatpush1.bf16.msra.mxu0 0
    %230 = vmatprep.subr.bf16.mxu0 0
    %231 = vmatpush1.bf16.msra.mxu0 0
    %232 = vmatprep.subr.bf16.mxu0 0
    %233 = vmatpush1.bf16.msra.mxu0 0
    %234 = vmatprep.subr.bf16.mxu0 0
    %235 = vmatpush1.bf16.msra.mxu0 0
    %236 = vmatprep.subr.bf16.mxu0 0
    %237 = vmatpush1.bf16.msra.mxu0 0
    %238 = vmatprep.subr.bf16.mxu0 0
    %239 = vmatpush1.bf16.msra.mxu0 0
    %240 = vmatprep.mubr.bf16.mxu0 0
    %241 = vmatmul.mubr.bf16.gmra.mrb[0].mxu0 %v136
    %v242 = vpop.f32.mrb[0].mxu0
    %v243 = vadd.f32 %v158, %v242
    %v244 = vpop.f32.mrb[0].mxu0
    %v245 = vpop.f32.mrb[0].mxu0
    %v246 = vpop.f32.mrb[0].mxu0
    %247 = vdwg.mxu0
    %248 = vst [vmem:[#allocation2] sm:$0x3] %v243
    // Predicated region
    $region22: #{roberta_class_forward.3} parent=1 // pred_check
      _
    $region23: #{roberta_class_forward.3} parent=1 // pred_check_branch
      %250 = sbr.rel (0) target = $region25
    $region24: #{roberta_class_forward.3} parent=1 // pred_region
      %s252 = ssub.s32 32, 32
      %253 = vsyncadd [#allocation3], %s252
      %s255 = sshll.u32 [#allocation2], 4
      %s256 = int_to_ptr.vmem [resolvable:$true] %s255
      %258 = dma.vmem_to_hbm [thread:$0]  %s256, 32, %s5, [#allocation3]
    $region25: #{roberta_class_forward.3} parent=1 // pred_fallthru
      _
    // Predicated region
    $region26: #{roberta_class_forward.3} parent=1 // pred_check
      _
    $region27: #{roberta_class_forward.3} parent=1 // pred_check_branch
      %260 = sbr.rel (0) target = $region29
    $region28: #{roberta_class_forward.3} parent=1 // pred_region
      %261 = dma.done [#allocation3], 32
    $region29: #{roberta_class_forward.3} parent=1 // pred_fallthru
      _
    %262 = vsyncpa [#allocation3], 1

// kernel: roberta_class_forward.2
$region0: #{roberta_class_forward.2}
  #allocation0 [shape = 'u32[]', space=smem, size = 0x4, offset = 0x4, fixed_abs, tag = 'smem constant byte address 0x4 - core index']
  #allocation1 [shape = 'u32[144,128]{1,0:T(1,128)}', space=vmem, size = 0x12000, scoped, tag = 'internal scratch']
  %s0 = inlined_call_operand.vmem [shape: f32[16,128], index: 0, kind: input, shape index: {}]
  %s1 = inlined_call_operand.vmem [shape: f32[2,1,8], index: 1, kind: input, shape index: {}]
  %s2 = inlined_call_operand.vmem [shape: f32[1,128], index: 2, kind: input, shape index: {}]
  %s3 = inlined_call_operand.vmem [shape: f32[1,128], index: 3, kind: input, shape index: {}]
  %s4 = inlined_call_operand.hbm [shape: bf16[2,128,384], index: 4, kind: input, shape index: {}]
  %s5 = inlined_call_operand.vmem [shape: f32[2,1,384], index: 5, kind: input, shape index: {}]
  %s6 = inlined_call_operand.vmem [shape: bf16[2,128,128], index: 6, kind: input, shape index: {}]
  %s7 = inlined_call_operand.vmem [shape: f32[2,1,128], index: 7, kind: input, shape index: {}]
  %s8 = inlined_call_operand.vmem [shape: f32[2,1,128], index: 8, kind: input, shape index: {}]
  %s9 = inlined_call_operand.vmem [shape: f32[2,1,128], index: 9, kind: input, shape index: {}]
  %s10 = inlined_call_operand.vmem [shape: bf16[2,128,256], index: 10, kind: input, shape index: {}]
  %s11 = inlined_call_operand.vmem [shape: f32[2,1,256], index: 11, kind: input, shape index: {}]
  %s12 = inlined_call_operand.hbm [shape: bf16[2,256,128], index: 12, kind: input, shape index: {}]
  %s13 = inlined_call_operand.vmem [shape: f32[2,1,128], index: 13, kind: input, shape index: {}]
  %s14 = inlined_call_operand.vmem [shape: f32[2,1,128], index: 14, kind: input, shape index: {}]
  %s15 = inlined_call_operand.vmem [shape: f32[2,1,128], index: 15, kind: input, shape index: {}]
  %s16 = inlined_call_operand.vmem [shape: f32[16,128], index: 16, kind: output, shape index: {}]
  %s17 = sld [smem:[#allocation0]]
  $region109: #{roberta_class_forward.2} parent=0
    _
  %s19 = ssub.s32 1, %s17
  %s20 = scalar_select 0, %s19, %s17
  $region1: #{roberta_class_forward.2} parent=0
    #allocation2 [shape = 'u8[196608]{0}', space=vmem, size = 0x30000, scoped, tag = 'input window, operand 4']
    #allocation3 [shape = 's32[2]{0}', space=sflag, size = 0x8, scoped, tag = 'scoped memory for roberta_class_forward.2']
    #allocation4 [shape = 'u8[131072]{0}', space=vmem, size = 0x20000, scoped, tag = 'input window, operand 12']
    #allocation5 [shape = 's32[2]{0}', space=sflag, size = 0x8, scoped, tag = 'scoped memory for roberta_class_forward.2']
    %21 = vsyncpa [#allocation3], 0
    %s22 = scalar_lea.sflag [#allocation3], 1
    %23 = vsyncpa %s22, 0
    %24 = vsyncpa [#allocation5], 0
    %s25 = scalar_lea.sflag [#allocation5], 1
    %26 = vsyncpa %s25, 0
    loop: start=0, step=1, limit=6
    $region2: #{roberta_class_forward.2} parent=1 // loop_pre_header
      _
    $region3: #{roberta_class_forward.2} parent=1 // loop_header
      %s28 = sphi 0, %s32
      %p29 = scmp.ge.s32.totalorder %s28, 6
      %s35 = sphi 0, %s47
      %s36 = sphi 0, %s43
      %s37 = sphi 0, %s35
      %s38 = sphi 0, %s36
      %s39 = sphi 0, %s37
      %s40 = sphi 0, %s38
      %s50 = sphi 0, %s52
      %s53 = sphi 0, %s50
      %s54 = sphi 0, %s53
      %s70 = sphi 0, %s54
      %s76 = sphi 0, %s78
      %s79 = sphi 0, %s76
      %s80 = sphi 0, %s79
      %s96 = sphi 0, %s80
      %s100 = sphi 0, %s100
      %s102 = sphi 0, %s100
      %s103 = sphi 0, %s102
      %s117 = sphi 0, %s103
      %s121 = sphi 0, %s121
      %s123 = sphi 0, %s121
      %s124 = sphi 0, %s123
      %s138 = sphi 0, %s124
      %s144 = sphi 0, %s146
      %s147 = sphi 0, %s144
      %s148 = sphi 0, %s147
      %s164 = sphi 0, %s148
      %s170 = sphi 0, %s172
      %s173 = sphi 0, %s170
      %s174 = sphi 0, %s173
      %s190 = sphi 0, %s174
      %s196 = sphi 0, %s198
      %s199 = sphi 0, %s196
      %s200 = sphi 0, %s199
      %s216 = sphi 0, %s200
      %s222 = sphi 0, %s224
      %s225 = sphi 0, %s222
      %s226 = sphi 0, %s225
      %s242 = sphi 0, %s226
      %s248 = sphi 0, %s250
      %s251 = sphi 0, %s248
      %s252 = sphi 0, %s251
      %s268 = sphi 0, %s252
      %s274 = sphi 0, %s276
      %s277 = sphi 0, %s274
      %s278 = sphi 0, %s277
      %s294 = sphi 0, %s278
      %s300 = sphi 0, %s302
      %s303 = sphi 0, %s300
      %s304 = sphi 0, %s303
      %s320 = sphi 0, %s304
      %s326 = sphi 0, %s328
      %s329 = sphi 0, %s326
      %s330 = sphi 0, %s329
      %s346 = sphi 0, %s330
      %s352 = sphi 0, %s354
      %s355 = sphi 0, %s352
      %s356 = sphi 0, %s355
      %s372 = sphi 0, %s356
      %s378 = sphi 0, %s380
      %s381 = sphi 0, %s378
      %s382 = sphi 0, %s381
      %s398 = sphi 0, %s382
      %s404 = sphi 0, %s406
      %s407 = sphi 0, %s404
      %s408 = sphi 0, %s407
      %s424 = sphi 0, %s408
      %s430 = sphi 0, %s432
      %s433 = sphi 0, %s430
      %s434 = sphi 0, %s433
      %s450 = sphi 0, %s434
      %s456 = sphi 0, %s458
      %s459 = sphi 0, %s456
      %s460 = sphi 0, %s459
      %s476 = sphi 0, %s460
    $region4: #{roberta_class_forward.2} parent=1 // loop_header_branch
      %31 = sbr.rel (%p29) target = $region8
    $region5: #{roberta_class_forward.2} parent=1 // loop_body
      %s33 = ssub.s32 %s28, 1
      %s34 = ssub.s32 %s28, 2
      %s41 = sadd.s32 1, %s36
      %p42 = scmp.ge.s32.totalorder %s41, 2
      %s43 = scalar_select %p42, 0, %s41
      %s44 = sadd.s32 1, %s35
      %s45 = scalar_select %p42, %s44, %s35
      %p46 = scmp.ge.s32.totalorder %s45, 2
      %s47 = scalar_select %p46, 0, %s45
      %s48 = ssub.s32 %s35, %s47
      %p49 = scmp.eq.s32.totalorder %s48, 0
      %s51 = sadd.s32 %s50, 1
      %s52 = scalar_select %p49, %s50, %s51
      %p55 = pneg %p49
      %p56 = scmp.eq.s32.totalorder %s28, 3
      %p57 = por %p55, %p56
      %p58 = scmp.ne.s32.totalorder %s50, %s53
      %p59 = scmp.eq.s32.totalorder %s28, 0
      %p60 = por %p58, %p59
      %p61 = scmp.ne.s32.totalorder %s50, %s53
      %p62 = scmp.eq.s32.totalorder %s33, 3
      %p63 = por %p61, %p62
      %p64 = scmp.ne.s32.totalorder %s53, %s54
      %p65 = scmp.eq.s32.totalorder %s33, 0
      %p66 = por %p64, %p65
      %p67 = scmp.ne.s32.totalorder %s53, %s54
      %p68 = scmp.eq.s32.totalorder %s34, 3
      %p69 = por %p67, %p68
      %p71 = scmp.ne.s32.totalorder %s54, %s70
      %p72 = scmp.eq.s32.totalorder %s34, 0
      %p73 = por %p71, %p72
      %s74 = ssub.s32 %s35, %s47
      %p75 = scmp.eq.s32.totalorder %s74, 0
      %s77 = sadd.s32 %s76, 1
      %s78 = scalar_select %p75, %s76, %s77
      %p81 = pneg %p75
      %p82 = scmp.eq.s32.totalorder %s28, 3
      %p83 = por %p81, %p82
      %p84 = scmp.ne.s32.totalorder %s76, %s79
      %p85 = scmp.eq.s32.totalorder %s28, 0
      %p86 = por %p84, %p85
      %p87 = scmp.ne.s32.totalorder %s76, %s79
      %p88 = scmp.eq.s32.totalorder %s33, 3
      %p89 = por %p87, %p88
      %p90 = scmp.ne.s32.totalorder %s79, %s80
      %p91 = scmp.eq.s32.totalorder %s33, 0
      %p92 = por %p90, %p91
      %p93 = scmp.ne.s32.totalorder %s79, %s80
      %p94 = scmp.eq.s32.totalorder %s34, 3
      %p95 = por %p93, %p94
      %p97 = scmp.ne.s32.totalorder %s80, %s96
      %p98 = scmp.eq.s32.totalorder %s34, 0
      %p99 = por %p97, %p98
      %s101 = sadd.s32 %s100, 1
      %p104 = scmp.eq.s32.totalorder %s28, 3
      %p105 = scmp.ne.s32.totalorder %s100, %s102
      %p106 = scmp.eq.s32.totalorder %s28, 0
      %p107 = por %p105, %p106
      %p108 = scmp.ne.s32.totalorder %s100, %s102
      %p109 = scmp.eq.s32.totalorder %s33, 3
      %p110 = por %p108, %p109
      %p111 = scmp.ne.s32.totalorder %s102, %s103
      %p112 = scmp.eq.s32.totalorder %s33, 0
      %p113 = por %p111, %p112
      %p114 = scmp.ne.s32.totalorder %s102, %s103
      %p115 = scmp.eq.s32.totalorder %s34, 3
      %p116 = por %p114, %p115
      %p118 = scmp.ne.s32.totalorder %s103, %s117
      %p119 = scmp.eq.s32.totalorder %s34, 0
      %p120 = por %p118, %p119
      %s122 = sadd.s32 %s121, 1
      %p125 = scmp.eq.s32.totalorder %s28, 3
      %p126 = scmp.ne.s32.totalorder %s121, %s123
      %p127 = scmp.eq.s32.totalorder %s28, 0
      %p128 = por %p126, %p127
      %p129 = scmp.ne.s32.totalorder %s121, %s123
      %p130 = scmp.eq.s32.totalorder %s33, 3
      %p131 = por %p129, %p130
      %p132 = scmp.ne.s32.totalorder %s123, %s124
      %p133 = scmp.eq.s32.totalorder %s33, 0
      %p134 = por %p132, %p133
      %p135 = scmp.ne.s32.totalorder %s123, %s124
      %p136 = scmp.eq.s32.totalorder %s34, 3
      %p137 = por %p135, %p136
      %p139 = scmp.ne.s32.totalorder %s124, %s138
      %p140 = scmp.eq.s32.totalorder %s34, 0
      %p141 = por %p139, %p140
      %s142 = ssub.s32 %s36, %s43
      %p143 = scmp.eq.s32.totalorder %s142, 0
      %s145 = sadd.s32 %s144, 1
      %s146 = scalar_select %p143, %s144, %s145
      %p149 = pneg %p143
      %p150 = scmp.eq.s32.totalorder %s28, 3
      %p151 = por %p149, %p150
      %p152 = scmp.ne.s32.totalorder %s144, %s147
      %p153 = scmp.eq.s32.totalorder %s28, 0
      %p154 = por %p152, %p153
      %p155 = scmp.ne.s32.totalorder %s144, %s147
      %p156 = scmp.eq.s32.totalorder %s33, 3
      %p157 = por %p155, %p156
      %p158 = scmp.ne.s32.totalorder %s147, %s148
      %p159 = scmp.eq.s32.totalorder %s33, 0
      %p160 = por %p158, %p159
      %p161 = scmp.ne.s32.totalorder %s147, %s148
      %p162 = scmp.eq.s32.totalorder %s34, 3
      %p163 = por %p161, %p162
      %p165 = scmp.ne.s32.totalorder %s148, %s164
      %p166 = scmp.eq.s32.totalorder %s34, 0
      %p167 = por %p165, %p166
      %s168 = ssub.s32 %s36, %s43
      %p169 = scmp.eq.s32.totalorder %s168, 0
      %s171 = sadd.s32 %s170, 1
      %s172 = scalar_select %p169, %s170, %s171
      %p175 = pneg %p169
      %p176 = scmp.eq.s32.totalorder %s28, 3
      %p177 = por %p175, %p176
      %p178 = scmp.ne.s32.totalorder %s170, %s173
      %p179 = scmp.eq.s32.totalorder %s28, 0
      %p180 = por %p178, %p179
      %p181 = scmp.ne.s32.totalorder %s170, %s173
      %p182 = scmp.eq.s32.totalorder %s33, 3
      %p183 = por %p181, %p182
      %p184 = scmp.ne.s32.totalorder %s173, %s174
      %p185 = scmp.eq.s32.totalorder %s33, 0
      %p186 = por %p184, %p185
      %p187 = scmp.ne.s32.totalorder %s173, %s174
      %p188 = scmp.eq.s32.totalorder %s34, 3
      %p189 = por %p187, %p188
      %p191 = scmp.ne.s32.totalorder %s174, %s190
      %p192 = scmp.eq.s32.totalorder %s34, 0
      %p193 = por %p191, %p192
      %s194 = ssub.s32 %s36, %s43
      %p195 = scmp.eq.s32.totalorder %s194, 0
      %s197 = sadd.s32 %s196, 1
      %s198 = scalar_select %p195, %s196, %s197
      %p201 = pneg %p195
      %p202 = scmp.eq.s32.totalorder %s28, 3
      %p203 = por %p201, %p202
      %p204 = scmp.ne.s32.totalorder %s196, %s199
      %p205 = scmp.eq.s32.totalorder %s28, 0
      %p206 = por %p204, %p205
      %p207 = scmp.ne.s32.totalorder %s196, %s199
      %p208 = scmp.eq.s32.totalorder %s33, 3
      %p209 = por %p207, %p208
      %p210 = scmp.ne.s32.totalorder %s199, %s200
      %p211 = scmp.eq.s32.totalorder %s33, 0
      %p212 = por %p210, %p211
      %p213 = scmp.ne.s32.totalorder %s199, %s200
      %p214 = scmp.eq.s32.totalorder %s34, 3
      %p215 = por %p213, %p214
      %p217 = scmp.ne.s32.totalorder %s200, %s216
      %p218 = scmp.eq.s32.totalorder %s34, 0
      %p219 = por %p217, %p218
      %s220 = ssub.s32 %s36, %s43
      %p221 = scmp.eq.s32.totalorder %s220, 0
      %s223 = sadd.s32 %s222, 1
      %s224 = scalar_select %p221, %s222, %s223
      %p227 = pneg %p221
      %p228 = scmp.eq.s32.totalorder %s28, 3
      %p229 = por %p227, %p228
      %p230 = scmp.ne.s32.totalorder %s222, %s225
      %p231 = scmp.eq.s32.totalorder %s28, 0
      %p232 = por %p230, %p231
      %p233 = scmp.ne.s32.totalorder %s222, %s225
      %p234 = scmp.eq.s32.totalorder %s33, 3
      %p235 = por %p233, %p234
      %p236 = scmp.ne.s32.totalorder %s225, %s226
      %p237 = scmp.eq.s32.totalorder %s33, 0
      %p238 = por %p236, %p237
      %p239 = scmp.ne.s32.totalorder %s225, %s226
      %p240 = scmp.eq.s32.totalorder %s34, 3
      %p241 = por %p239, %p240
      %p243 = scmp.ne.s32.totalorder %s226, %s242
      %p244 = scmp.eq.s32.totalorder %s34, 0
      %p245 = por %p243, %p244
      %s246 = ssub.s32 %s36, %s43
      %p247 = scmp.eq.s32.totalorder %s246, 0
      %s249 = sadd.s32 %s248, 1
      %s250 = scalar_select %p247, %s248, %s249
      %p253 = pneg %p247
      %p254 = scmp.eq.s32.totalorder %s28, 3
      %p255 = por %p253, %p254
      %p256 = scmp.ne.s32.totalorder %s248, %s251
      %p257 = scmp.eq.s32.totalorder %s28, 0
      %p258 = por %p256, %p257
      %p259 = scmp.ne.s32.totalorder %s248, %s251
      %p260 = scmp.eq.s32.totalorder %s33, 3
      %p261 = por %p259, %p260
      %p262 = scmp.ne.s32.totalorder %s251, %s252
      %p263 = scmp.eq.s32.totalorder %s33, 0
      %p264 = por %p262, %p263
      %p265 = scmp.ne.s32.totalorder %s251, %s252
      %p266 = scmp.eq.s32.totalorder %s34, 3
      %p267 = por %p265, %p266
      %p269 = scmp.ne.s32.totalorder %s252, %s268
      %p270 = scmp.eq.s32.totalorder %s34, 0
      %p271 = por %p269, %p270
      %s272 = ssub.s32 %s36, %s43
      %p273 = scmp.eq.s32.totalorder %s272, 0
      %s275 = sadd.s32 %s274, 1
      %s276 = scalar_select %p273, %s274, %s275
      %p279 = pneg %p273
      %p280 = scmp.eq.s32.totalorder %s28, 3
      %p281 = por %p279, %p280
      %p282 = scmp.ne.s32.totalorder %s274, %s277
      %p283 = scmp.eq.s32.totalorder %s28, 0
      %p284 = por %p282, %p283
      %p285 = scmp.ne.s32.totalorder %s274, %s277
      %p286 = scmp.eq.s32.totalorder %s33, 3
      %p287 = por %p285, %p286
      %p288 = scmp.ne.s32.totalorder %s277, %s278
      %p289 = scmp.eq.s32.totalorder %s33, 0
      %p290 = por %p288, %p289
      %p291 = scmp.ne.s32.totalorder %s277, %s278
      %p292 = scmp.eq.s32.totalorder %s34, 3
      %p293 = por %p291, %p292
      %p295 = scmp.ne.s32.totalorder %s278, %s294
      %p296 = scmp.eq.s32.totalorder %s34, 0
      %p297 = por %p295, %p296
      %s298 = ssub.s32 %s36, %s43
      %p299 = scmp.eq.s32.totalorder %s298, 0
      %s301 = sadd.s32 %s300, 1
      %s302 = scalar_select %p299, %s300, %s301
      %p305 = pneg %p299
      %p306 = scmp.eq.s32.totalorder %s28, 3
      %p307 = por %p305, %p306
      %p308 = scmp.ne.s32.totalorder %s300, %s303
      %p309 = scmp.eq.s32.totalorder %s28, 0
      %p310 = por %p308, %p309
      %p311 = scmp.ne.s32.totalorder %s300, %s303
      %p312 = scmp.eq.s32.totalorder %s33, 3
      %p313 = por %p311, %p312
      %p314 = scmp.ne.s32.totalorder %s303, %s304
      %p315 = scmp.eq.s32.totalorder %s33, 0
      %p316 = por %p314, %p315
      %p317 = scmp.ne.s32.totalorder %s303, %s304
      %p318 = scmp.eq.s32.totalorder %s34, 3
      %p319 = por %p317, %p318
      %p321 = scmp.ne.s32.totalorder %s304, %s320
      %p322 = scmp.eq.s32.totalorder %s34, 0
      %p323 = por %p321, %p322
      %s324 = ssub.s32 %s36, %s43
      %p325 = scmp.eq.s32.totalorder %s324, 0
      %s327 = sadd.s32 %s326, 1
      %s328 = scalar_select %p325, %s326, %s327
      %p331 = pneg %p325
      %p332 = scmp.eq.s32.totalorder %s28, 3
      %p333 = por %p331, %p332
      %p334 = scmp.ne.s32.totalorder %s326, %s329
      %p335 = scmp.eq.s32.totalorder %s28, 0
      %p336 = por %p334, %p335
      %p337 = scmp.ne.s32.totalorder %s326, %s329
      %p338 = scmp.eq.s32.totalorder %s33, 3
      %p339 = por %p337, %p338
      %p340 = scmp.ne.s32.totalorder %s329, %s330
      %p341 = scmp.eq.s32.totalorder %s33, 0
      %p342 = por %p340, %p341
      %p343 = scmp.ne.s32.totalorder %s329, %s330
      %p344 = scmp.eq.s32.totalorder %s34, 3
      %p345 = por %p343, %p344
      %p347 = scmp.ne.s32.totalorder %s330, %s346
      %p348 = scmp.eq.s32.totalorder %s34, 0
      %p349 = por %p347, %p348
      %s350 = ssub.s32 %s36, %s43
      %p351 = scmp.eq.s32.totalorder %s350, 0
      %s353 = sadd.s32 %s352, 1
      %s354 = scalar_select %p351, %s352, %s353
      %p357 = pneg %p351
      %p358 = scmp.eq.s32.totalorder %s28, 3
      %p359 = por %p357, %p358
      %p360 = scmp.ne.s32.totalorder %s352, %s355
      %p361 = scmp.eq.s32.totalorder %s28, 0
      %p362 = por %p360, %p361
      %p363 = scmp.ne.s32.totalorder %s352, %s355
      %p364 = scmp.eq.s32.totalorder %s33, 3
      %p365 = por %p363, %p364
      %p366 = scmp.ne.s32.totalorder %s355, %s356
      %p367 = scmp.eq.s32.totalorder %s33, 0
      %p368 = por %p366, %p367
      %p369 = scmp.ne.s32.totalorder %s355, %s356
      %p370 = scmp.eq.s32.totalorder %s34, 3
      %p371 = por %p369, %p370
      %p373 = scmp.ne.s32.totalorder %s356, %s372
      %p374 = scmp.eq.s32.totalorder %s34, 0
      %p375 = por %p373, %p374
      %s376 = ssub.s32 %s36, %s43
      %p377 = scmp.eq.s32.totalorder %s376, 0
      %s379 = sadd.s32 %s378, 1
      %s380 = scalar_select %p377, %s378, %s379
      %p383 = pneg %p377
      %p384 = scmp.eq.s32.totalorder %s28, 3
      %p385 = por %p383, %p384
      %p386 = scmp.ne.s32.totalorder %s378, %s381
      %p387 = scmp.eq.s32.totalorder %s28, 0
      %p388 = por %p386, %p387
      %p389 = scmp.ne.s32.totalorder %s378, %s381
      %p390 = scmp.eq.s32.totalorder %s33, 3
      %p391 = por %p389, %p390
      %p392 = scmp.ne.s32.totalorder %s381, %s382
      %p393 = scmp.eq.s32.totalorder %s33, 0
      %p394 = por %p392, %p393
      %p395 = scmp.ne.s32.totalorder %s381, %s382
      %p396 = scmp.eq.s32.totalorder %s34, 3
      %p397 = por %p395, %p396
      %p399 = scmp.ne.s32.totalorder %s382, %s398
      %p400 = scmp.eq.s32.totalorder %s34, 0
      %p401 = por %p399, %p400
      %s402 = ssub.s32 %s36, %s43
      %p403 = scmp.eq.s32.totalorder %s402, 0
      %s405 = sadd.s32 %s404, 1
      %s406 = scalar_select %p403, %s404, %s405
      %p409 = pneg %p403
      %p410 = scmp.eq.s32.totalorder %s28, 3
      %p411 = por %p409, %p410
      %p412 = scmp.ne.s32.totalorder %s404, %s407
      %p413 = scmp.eq.s32.totalorder %s28, 0
      %p414 = por %p412, %p413
      %p415 = scmp.ne.s32.totalorder %s404, %s407
      %p416 = scmp.eq.s32.totalorder %s33, 3
      %p417 = por %p415, %p416
      %p418 = scmp.ne.s32.totalorder %s407, %s408
      %p419 = scmp.eq.s32.totalorder %s33, 0
      %p420 = por %p418, %p419
      %p421 = scmp.ne.s32.totalorder %s407, %s408
      %p422 = scmp.eq.s32.totalorder %s34, 3
      %p423 = por %p421, %p422
      %p425 = scmp.ne.s32.totalorder %s408, %s424
      %p426 = scmp.eq.s32.totalorder %s34, 0
      %p427 = por %p425, %p426
      %s428 = ssub.s32 %s36, %s43
      %p429 = scmp.eq.s32.totalorder %s428, 0
      %s431 = sadd.s32 %s430, 1
      %s432 = scalar_select %p429, %s430, %s431
      %p435 = pneg %p429
      %p436 = scmp.eq.s32.totalorder %s28, 3
      %p437 = por %p435, %p436
      %p438 = scmp.ne.s32.totalorder %s430, %s433
      %p439 = scmp.eq.s32.totalorder %s28, 0
      %p440 = por %p438, %p439
      %p441 = scmp.ne.s32.totalorder %s430, %s433
      %p442 = scmp.eq.s32.totalorder %s33, 3
      %p443 = por %p441, %p442
      %p444 = scmp.ne.s32.totalorder %s433, %s434
      %p445 = scmp.eq.s32.totalorder %s33, 0
      %p446 = por %p444, %p445
      %p447 = scmp.ne.s32.totalorder %s433, %s434
      %p448 = scmp.eq.s32.totalorder %s34, 3
      %p449 = por %p447, %p448
      %p451 = scmp.ne.s32.totalorder %s434, %s450
      %p452 = scmp.eq.s32.totalorder %s34, 0
      %p453 = por %p451, %p452
      %s454 = ssub.s32 %s35, %s47
      %p455 = scmp.eq.s32.totalorder %s454, 0
      %s457 = sadd.s32 %s456, 1
      %s458 = scalar_select %p455, %s456, %s457
      %p461 = pneg %p455
      %p462 = scmp.eq.s32.totalorder %s28, 3
      %p463 = por %p461, %p462
      %p464 = scmp.ne.s32.totalorder %s456, %s459
      %p465 = scmp.eq.s32.totalorder %s28, 0
      %p466 = por %p464, %p465
      %p467 = scmp.ne.s32.totalorder %s456, %s459
      %p468 = scmp.eq.s32.totalorder %s33, 3
      %p469 = por %p467, %p468
      %p470 = scmp.ne.s32.totalorder %s459, %s460
      %p471 = scmp.eq.s32.totalorder %s33, 0
      %p472 = por %p470, %p471
      %p473 = scmp.ne.s32.totalorder %s459, %s460
      %p474 = scmp.eq.s32.totalorder %s34, 3
      %p475 = por %p473, %p474
      %p477 = scmp.ne.s32.totalorder %s460, %s476
      %p478 = scmp.eq.s32.totalorder %s34, 0
      %p479 = por %p477, %p478
      %p480 = scmp.le.s32.totalorder 1, %s28
      %p481 = scmp.lt.s32.totalorder %s28, 5
      %p482 = pnand %p480, %p481
      %p483 = pneg %p482
      // Predicated region
      $region9: #{roberta_class_forward.2} parent=5 // pred_check
        _
      $region10: #{roberta_class_forward.2} parent=5 // pred_check_branch
        %485 = sbr.rel (%p482) target = $region12
      $region11: #{roberta_class_forward.2} parent=5 // pred_region
        %s486 = ssub.s32 %s28, 1
        // Predicated region
        $region13: #{roberta_class_forward.2} parent=11 // pred_check
          %p487 = pneg %p113
        $region14: #{roberta_class_forward.2} parent=11 // pred_check_branch
          %489 = sbr.rel (%p487) target = $region16
        $region15: #{roberta_class_forward.2} parent=11 // pred_region
          _
        $region16: #{roberta_class_forward.2} parent=11 // pred_fallthru
          _
        // Predicated region
        $region17: #{roberta_class_forward.2} parent=11 // pred_check
          %p490 = pneg %p134
        $region18: #{roberta_class_forward.2} parent=11 // pred_check_branch
          %492 = sbr.rel (%p490) target = $region20
        $region19: #{roberta_class_forward.2} parent=11 // pred_region
          _
        $region20: #{roberta_class_forward.2} parent=11 // pred_fallthru
          _
      $region12: #{roberta_class_forward.2} parent=5 // pred_fallthru
        _
      %p493 = scmp.lt.s32.totalorder %s28, 4
      // Predicated region
      $region21: #{roberta_class_forward.2} parent=5 // pred_check
        %p494 = pneg %p493
      $region22: #{roberta_class_forward.2} parent=5 // pred_check_branch
        %496 = sbr.rel (%p494) target = $region24
      $region23: #{roberta_class_forward.2} parent=5 // pred_region
        // Predicated region
        $region25: #{roberta_class_forward.2} parent=23 // pred_check
          %p497 = pneg %p60
        $region26: #{roberta_class_forward.2} parent=23 // pred_check_branch
          %499 = sbr.rel (%p497) target = $region28
        $region27: #{roberta_class_forward.2} parent=23 // pred_region
          %p500 = scmp.lt.s32.totalorder %s35, 1
          %s501 = scalar_select %p500, %s35, 1
          %s502 = smul.addr %s501, 8
          %s503 = scalar_lea.vmem %s0, %s502
        $region28: #{roberta_class_forward.2} parent=23 // pred_fallthru
          _
        // Predicated region
        $region29: #{roberta_class_forward.2} parent=23 // pred_check
          %p504 = pneg %p86
        $region30: #{roberta_class_forward.2} parent=23 // pred_check_branch
          %506 = sbr.rel (%p504) target = $region32
        $region31: #{roberta_class_forward.2} parent=23 // pred_region
          %p507 = scmp.lt.s32.totalorder %s35, 1
          %s508 = scalar_select %p507, %s35, 1
          %s509 = scalar_lea.vmem %s1, %s508
        $region32: #{roberta_class_forward.2} parent=23 // pred_fallthru
          _
        // Predicated region
        $region33: #{roberta_class_forward.2} parent=23 // pred_check
          %p510 = pneg %p154
        $region34: #{roberta_class_forward.2} parent=23 // pred_check_branch
          %512 = sbr.rel (%p510) target = $region36
        $region35: #{roberta_class_forward.2} parent=23 // pred_region
          %s513 = sand.u32 %s144, 1
          %s514 = scalar_lea.sflag [#allocation3], %s513
          %s515 = sand.u32 %s144, 1
          %s516 = smul.addr %s515, 192
          %s517 = scalar_lea.vmem [#allocation2], %s516
          %s519 = ssub.s32 3072, 3072
          %520 = vsyncadd %s514, %s519
          %s521 = smul.addr %s36, 48
          %s522 = smul.addr %s521, 64
          %s523 = scalar_lea.hbm %s4, %s522
          %s524 = sshll.u32 %s517, 4
          %s525 = int_to_ptr.vmem [resolvable:$true] %s524
          %530 = dma.hbm_to_vmem [thread:$0]  %s523, 3072, %s525, %s514, 192, 192, 12
        $region36: #{roberta_class_forward.2} parent=23 // pred_fallthru
          _
        // Predicated region
        $region37: #{roberta_class_forward.2} parent=23 // pred_check
          %p531 = pneg %p180
        $region38: #{roberta_class_forward.2} parent=23 // pred_check_branch
          %533 = sbr.rel (%p531) target = $region40
        $region39: #{roberta_class_forward.2} parent=23 // pred_region
          %p534 = scmp.lt.s32.totalorder %s36, 1
          %s535 = scalar_select %p534, %s36, 1
          %s536 = smul.addr %s535, 3
          %s537 = scalar_lea.vmem %s5, %s536
        $region40: #{roberta_class_forward.2} parent=23 // pred_fallthru
          _
        // Predicated region
        $region41: #{roberta_class_forward.2} parent=23 // pred_check
          %p538 = pneg %p206
        $region42: #{roberta_class_forward.2} parent=23 // pred_check_branch
          %540 = sbr.rel (%p538) target = $region44
        $region43: #{roberta_class_forward.2} parent=23 // pred_region
          %p541 = scmp.lt.s32.totalorder %s36, 1
          %s542 = scalar_select %p541, %s36, 1
          %s543 = smul.addr %s542, 16
          %s544 = smul.addr %s543, 4
          %s545 = scalar_lea.vmem %s6, %s544
        $region44: #{roberta_class_forward.2} parent=23 // pred_fallthru
          _
        // Predicated region
        $region45: #{roberta_class_forward.2} parent=23 // pred_check
          %p546 = pneg %p232
        $region46: #{roberta_class_forward.2} parent=23 // pred_check_branch
          %548 = sbr.rel (%p546) target = $region48
        $region47: #{roberta_class_forward.2} parent=23 // pred_region
          %p549 = scmp.lt.s32.totalorder %s36, 1
          %s550 = scalar_select %p549, %s36, 1
          %s551 = scalar_lea.vmem %s7, %s550
        $region48: #{roberta_class_forward.2} parent=23 // pred_fallthru
          _
        // Predicated region
        $region49: #{roberta_class_forward.2} parent=23 // pred_check
          %p552 = pneg %p258
        $region50: #{roberta_class_forward.2} parent=23 // pred_check_branch
          %554 = sbr.rel (%p552) target = $region52
        $region51: #{roberta_class_forward.2} parent=23 // pred_region
          %p555 = scmp.lt.s32.totalorder %s36, 1
          %s556 = scalar_select %p555, %s36, 1
          %s557 = scalar_lea.vmem %s8, %s556
        $region52: #{roberta_class_forward.2} parent=23 // pred_fallthru
          _
        // Predicated region
        $region53: #{roberta_class_forward.2} parent=23 // pred_check
          %p558 = pneg %p284
        $region54: #{roberta_class_forward.2} parent=23 // pred_check_branch
          %560 = sbr.rel (%p558) target = $region56
        $region55: #{roberta_class_forward.2} parent=23 // pred_region
          %p561 = scmp.lt.s32.totalorder %s36, 1
          %s562 = scalar_select %p561, %s36, 1
          %s563 = scalar_lea.vmem %s9, %s562
        $region56: #{roberta_class_forward.2} parent=23 // pred_fallthru
          _
        // Predicated region
        $region57: #{roberta_class_forward.2} parent=23 // pred_check
          %p564 = pneg %p310
        $region58: #{roberta_class_forward.2} parent=23 // pred_check_branch
          %566 = sbr.rel (%p564) target = $region60
        $region59: #{roberta_class_forward.2} parent=23 // pred_region
          %p567 = scmp.lt.s32.totalorder %s36, 1
          %s568 = scalar_select %p567, %s36, 1
          %s569 = smul.addr %s568, 32
          %s570 = smul.addr %s569, 4
          %s571 = scalar_lea.vmem %s10, %s570
        $region60: #{roberta_class_forward.2} parent=23 // pred_fallthru
          _
        // Predicated region
        $region61: #{roberta_class_forward.2} parent=23 // pred_check
          %p572 = pneg %p336
        $region62: #{roberta_class_forward.2} parent=23 // pred_check_branch
          %574 = sbr.rel (%p572) target = $region64
        $region63: #{roberta_class_forward.2} parent=23 // pred_region
          %p575 = scmp.lt.s32.totalorder %s36, 1
          %s576 = scalar_select %p575, %s36, 1
          %s577 = smul.addr %s576, 2
          %s578 = scalar_lea.vmem %s11, %s577
        $region64: #{roberta_class_forward.2} parent=23 // pred_fallthru
          _
        // Predicated region
        $region65: #{roberta_class_forward.2} parent=23 // pred_check
          %p579 = pneg %p362
        $region66: #{roberta_class_forward.2} parent=23 // pred_check_branch
          %581 = sbr.rel (%p579) target = $region68
        $region67: #{roberta_class_forward.2} parent=23 // pred_region
          %s582 = sand.u32 %s352, 1
          %s583 = scalar_lea.sflag [#allocation5], %s582
          %s584 = sand.u32 %s352, 1
          %s585 = smul.addr %s584, 128
          %s586 = scalar_lea.vmem [#allocation4], %s585
          %s588 = ssub.s32 2048, 2048
          %589 = vsyncadd %s583, %s588
          %s590 = smul.addr %s36, 32
          %s591 = smul.addr %s590, 64
          %s592 = scalar_lea.hbm %s12, %s591
          %s593 = sshll.u32 %s586, 4
          %s594 = int_to_ptr.vmem [resolvable:$true] %s593
          %599 = dma.hbm_to_vmem [thread:$0]  %s592, 2048, %s594, %s583, 64, 64, 4
        $region68: #{roberta_class_forward.2} parent=23 // pred_fallthru
          _
        // Predicated region
        $region69: #{roberta_class_forward.2} parent=23 // pred_check
          %p600 = pneg %p388
        $region70: #{roberta_class_forward.2} parent=23 // pred_check_branch
          %602 = sbr.rel (%p600) target = $region72
        $region71: #{roberta_class_forward.2} parent=23 // pred_region
          %p603 = scmp.lt.s32.totalorder %s36, 1
          %s604 = scalar_select %p603, %s36, 1
          %s605 = scalar_lea.vmem %s13, %s604
        $region72: #{roberta_class_forward.2} parent=23 // pred_fallthru
          _
        // Predicated region
        $region73: #{roberta_class_forward.2} parent=23 // pred_check
          %p606 = pneg %p414
        $region74: #{roberta_class_forward.2} parent=23 // pred_check_branch
          %608 = sbr.rel (%p606) target = $region76
        $region75: #{roberta_class_forward.2} parent=23 // pred_region
          %p609 = scmp.lt.s32.totalorder %s36, 1
          %s610 = scalar_select %p609, %s36, 1
          %s611 = scalar_lea.vmem %s14, %s610
        $region76: #{roberta_class_forward.2} parent=23 // pred_fallthru
          _
        // Predicated region
        $region77: #{roberta_class_forward.2} parent=23 // pred_check
          %p612 = pneg %p440
        $region78: #{roberta_class_forward.2} parent=23 // pred_check_branch
          %614 = sbr.rel (%p612) target = $region80
        $region79: #{roberta_class_forward.2} parent=23 // pred_region
          %p615 = scmp.lt.s32.totalorder %s36, 1
          %s616 = scalar_select %p615, %s36, 1
          %s617 = scalar_lea.vmem %s15, %s616
        $region80: #{roberta_class_forward.2} parent=23 // pred_fallthru
          _
      $region24: #{roberta_class_forward.2} parent=5 // pred_fallthru
        _
      %p618 = scmp.le.s32.totalorder 1, %s28
      %p619 = scmp.lt.s32.totalorder %s28, 5
      %p620 = pnand %p618, %p619
      %p621 = pneg %p620
      // Predicated region
      $region81: #{roberta_class_forward.2} parent=5 // pred_check
        _
      $region82: #{roberta_class_forward.2} parent=5 // pred_check_branch
        %623 = sbr.rel (%p620) target = $region84
      $region83: #{roberta_class_forward.2} parent=5 // pred_region
        %s624 = ssub.s32 %s28, 1
        %s625 = sand.u32 %s147, 1
        %s626 = scalar_lea.sflag [#allocation3], %s625
        %s627 = sand.u32 %s147, 1
        %s628 = smul.addr %s627, 192
        %s629 = scalar_lea.vmem [#allocation2], %s628
        // Predicated region
        $region85: #{roberta_class_forward.2} parent=83 // pred_check
          %p630 = pneg %p160
        $region86: #{roberta_class_forward.2} parent=83 // pred_check_branch
          %632 = sbr.rel (%p630) target = $region88
        $region87: #{roberta_class_forward.2} parent=83 // pred_region
          %633 = dma.done %s626, 3072
        $region88: #{roberta_class_forward.2} parent=83 // pred_fallthru
          _
        %s634 = sand.u32 %s355, 1
        %s635 = scalar_lea.sflag [#allocation5], %s634
        %s636 = sand.u32 %s355, 1
        %s637 = smul.addr %s636, 128
        %s638 = scalar_lea.vmem [#allocation4], %s637
        // Predicated region
        $region89: #{roberta_class_forward.2} parent=83 // pred_check
          %p639 = pneg %p368
        $region90: #{roberta_class_forward.2} parent=83 // pred_check_branch
          %641 = sbr.rel (%p639) target = $region92
        $region91: #{roberta_class_forward.2} parent=83 // pred_region
          %642 = dma.done %s635, 2048
        $region92: #{roberta_class_forward.2} parent=83 // pred_fallthru
          _
        %p643 = scmp.lt.s32.totalorder %s37, 1
        %s644 = scalar_select %p643, %s37, 1
        %s645 = smul.addr %s644, 8
        %s646 = scalar_lea.vmem %s0, %s645
        %p647 = pneg %p66
        %p648 = pneg %p63
        %p649 = scmp.lt.s32.totalorder %s37, 1
        %s650 = scalar_select %p649, %s37, 1
        %s651 = scalar_lea.vmem %s1, %s650
        %p652 = pneg %p92
        %p653 = pneg %p89
        %p654 = pneg %p113
        %p655 = pneg %p110
        %p656 = pneg %p134
        %p657 = pneg %p131
        %s658 = sand.u32 %s147, 1
        %s659 = scalar_lea.sflag [#allocation3], %s658
        %s660 = sand.u32 %s147, 1
        %s661 = smul.addr %s660, 192
        %s662 = scalar_lea.vmem [#allocation2], %s661
        %p663 = pneg %p160
        %p664 = pneg %p157
        %p665 = scmp.lt.s32.totalorder %s38, 1
        %s666 = scalar_select %p665, %s38, 1
        %s667 = smul.addr %s666, 3
        %s668 = scalar_lea.vmem %s5, %s667
        %p669 = pneg %p186
        %p670 = pneg %p183
        %p671 = scmp.lt.s32.totalorder %s38, 1
        %s672 = scalar_select %p671, %s38, 1
        %s673 = smul.addr %s672, 16
        %s674 = smul.addr %s673, 4
        %s675 = scalar_lea.vmem %s6, %s674
        %p676 = pneg %p212
        %p677 = pneg %p209
        %p678 = scmp.lt.s32.totalorder %s38, 1
        %s679 = scalar_select %p678, %s38, 1
        %s680 = scalar_lea.vmem %s7, %s679
        %p681 = pneg %p238
        %p682 = pneg %p235
        %p683 = scmp.lt.s32.totalorder %s38, 1
        %s684 = scalar_select %p683, %s38, 1
        %s685 = scalar_lea.vmem %s8, %s684
        %p686 = pneg %p264
        %p687 = pneg %p261
        %p688 = scmp.lt.s32.totalorder %s38, 1
        %s689 = scalar_select %p688, %s38, 1
        %s690 = scalar_lea.vmem %s9, %s689
        %p691 = pneg %p290
        %p692 = pneg %p287
        %p693 = scmp.lt.s32.totalorder %s38, 1
        %s694 = scalar_select %p693, %s38, 1
        %s695 = smul.addr %s694, 32
        %s696 = smul.addr %s695, 4
        %s697 = scalar_lea.vmem %s10, %s696
        %p698 = pneg %p316
        %p699 = pneg %p313
        %p700 = scmp.lt.s32.totalorder %s38, 1
        %s701 = scalar_select %p700, %s38, 1
        %s702 = smul.addr %s701, 2
        %s703 = scalar_lea.vmem %s11, %s702
        %p704 = pneg %p342
        %p705 = pneg %p339
        %s706 = sand.u32 %s355, 1
        %s707 = scalar_lea.sflag [#allocation5], %s706
        %s708 = sand.u32 %s355, 1
        %s709 = smul.addr %s708, 128
        %s710 = scalar_lea.vmem [#allocation4], %s709
        %p711 = pneg %p368
        %p712 = pneg %p365
        %p713 = scmp.lt.s32.totalorder %s38, 1
        %s714 = scalar_select %p713, %s38, 1
        %s715 = scalar_lea.vmem %s13, %s714
        %p716 = pneg %p394
        %p717 = pneg %p391
        %p718 = scmp.lt.s32.totalorder %s38, 1
        %s719 = scalar_select %p718, %s38, 1
        %s720 = scalar_lea.vmem %s14, %s719
        %p721 = pneg %p420
        %p722 = pneg %p417
        %p723 = scmp.lt.s32.totalorder %s38, 1
        %s724 = scalar_select %p723, %s38, 1
        %s725 = scalar_lea.vmem %s15, %s724
        %p726 = pneg %p446
        %p727 = pneg %p443
        %p728 = pneg %p472
        %p729 = pneg %p469
        %p730 = scmp.lt.s32.totalorder %s37, 1
        %s731 = scalar_select %p730, %s37, 1
        %s732 = smul.addr %s731, 8
        %s733 = scalar_lea.vmem %s16, %s732
        %p734 = scmp.lt.s32.totalorder %s37, 1
        %s735 = scalar_select %p734, %s37, 1
        %s736 = smul.addr %s735, 8
        %s737 = scalar_lea.vmem %s0, %s736
        %p738 = scmp.lt.s32.totalorder %s37, 1
        %s739 = scalar_select %p738, %s37, 1
        %s740 = scalar_lea.vmem %s1, %s739
        %p741 = scmp.lt.s32.totalorder %s38, 1
        %s742 = scalar_select %p741, %s38, 1
        %s743 = smul.addr %s742, 3
        %s744 = scalar_lea.vmem %s5, %s743
        %p745 = scmp.lt.s32.totalorder %s38, 1
        %s746 = scalar_select %p745, %s38, 1
        %s747 = smul.addr %s746, 16
        %s748 = smul.addr %s747, 4
        %s749 = scalar_lea.vmem %s6, %s748
        %p750 = scmp.lt.s32.totalorder %s38, 1
        %s751 = scalar_select %p750, %s38, 1
        %s752 = scalar_lea.vmem %s7, %s751
        %p753 = scmp.lt.s32.totalorder %s38, 1
        %s754 = scalar_select %p753, %s38, 1
        %s755 = scalar_lea.vmem %s8, %s754
        %p756 = scmp.lt.s32.totalorder %s38, 1
        %s757 = scalar_select %p756, %s38, 1
        %s758 = scalar_lea.vmem %s9, %s757
        %p759 = scmp.lt.s32.totalorder %s38, 1
        %s760 = scalar_select %p759, %s38, 1
        %s761 = smul.addr %s760, 32
        %s762 = smul.addr %s761, 4
        %s763 = scalar_lea.vmem %s10, %s762
        %p764 = scmp.lt.s32.totalorder %s38, 1
        %s765 = scalar_select %p764, %s38, 1
        %s766 = smul.addr %s765, 2
        %s767 = scalar_lea.vmem %s11, %s766
        %p768 = scmp.lt.s32.totalorder %s38, 1
        %s769 = scalar_select %p768, %s38, 1
        %s770 = scalar_lea.vmem %s13, %s769
        %p771 = scmp.lt.s32.totalorder %s38, 1
        %s772 = scalar_select %p771, %s38, 1
        %s773 = scalar_lea.vmem %s14, %s772
        %p774 = scmp.lt.s32.totalorder %s38, 1
        %s775 = scalar_select %p774, %s38, 1
        %s776 = scalar_lea.vmem %s15, %s775
        %p777 = scmp.lt.s32.totalorder %s37, 1
        %s778 = scalar_select %p777, %s37, 1
        %s779 = smul.addr %s778, 8
        %s780 = scalar_lea.vmem %s16, %s779
        %p782 = scmp.eq.s32.totalorder %s38, 0
        // Predicated region
        $region93: #{roberta_class_forward.2} parent=83 // pred_check
          %p783 = pneg %p782
        $region94: #{roberta_class_forward.2} parent=83 // pred_check_branch
          %785 = sbr.rel (%p783) target = $region96
        $region95: #{roberta_class_forward.2} parent=83 // pred_region
          %v786 = vld [vmem:[%s737] sm:$0xff]
          %v787 = vld [vmem:[%s2] sm:$0x1]
          %v788 = vld [vmem:[%s3] sm:$0x1]
          %789 = vadd.xlane.f32.xlu0 %v786
          %v790 = vpop.xlane.xlu0 %789
          %v791 = vrcp.pop 128.0
          %v792 = vmul.f32 %v790, %v791
          %v793 = vsub.f32 %v786, %v792
          %v794 = vmul.f32 %v793, %v793
          %795 = vadd.xlane.f32.xlu0 %v794
          %v796 = vpop.xlane.xlu0 %795
          %v797 = vmul.f32 %v796, %v791
          %v798 = vadd.f32 %v797, 1e-05
          %v799 = vrsqrt.pop %v798
          %v800 = vmul.f32 %v793, %v799
          %v802 = vlaneseq
          %v803 = vshrl.u32 %v802, 7
          %v804 = vsub.s32 0, %v803
          %v805 = vrot.slane %v787, %v804
          %v807 = vmul.f32 %v800, %v805
          %v809 = vlaneseq
          %v810 = vshrl.u32 %v809, 7
          %v811 = vsub.s32 0, %v810
          %v812 = vrot.slane %v788, %v811
          %v814 = vadd.f32 %v807, %v812
          %815 = vst [vmem:[%s780] sm:$0xff] %v814
        $region96: #{roberta_class_forward.2} parent=83 // pred_fallthru
          _
        %v816 = vld [vmem:[%s780] sm:$0xff]
        %v817 = vpack.c.bf16 %v816, %v816
        %v818 = vld [vmem:[%s629] sm:$0xff]
        %v819 = vld [vmem:[%s629 + $0x8] sm:$0xf]
        %v820 = vld [vmem:[%s629 + $0xc] sm:$0xff]
        %v821 = vld [vmem:[%s629 + $0x14] sm:$0xf]
        %v822 = vld [vmem:[%s629 + $0x18] sm:$0xff]
        %v823 = vld [vmem:[%s629 + $0x20] sm:$0xf]
        %v824 = vld [vmem:[%s629 + $0x24] sm:$0xff]
        %v825 = vld [vmem:[%s629 + $0x2c] sm:$0xf]
        %v826 = vld [vmem:[%s629 + $0x30] sm:$0xff]
        %v827 = vld [vmem:[%s629 + $0x38] sm:$0xf]
        %v828 = vld [vmem:[%s629 + $0x3c] sm:$0xff]
        %v829 = vld [vmem:[%s629 + $0x44] sm:$0xf]
        %v830 = vld [vmem:[%s629 + $0x48] sm:$0xff]
        %v831 = vld [vmem:[%s629 + $0x50] sm:$0xf]
        %v832 = vld [vmem:[%s629 + $0x54] sm:$0xff]
        %v833 = vld [vmem:[%s629 + $0x5c] sm:$0xf]
        %v834 = vld [vmem:[%s629 + $0x60] sm:$0xff]
        %v835 = vld [vmem:[%s629 + $0x68] sm:$0xf]
        %v836 = vld [vmem:[%s629 + $0x6c] sm:$0xff]
        %v837 = vld [vmem:[%s629 + $0x74] sm:$0xf]
        %v838 = vld [vmem:[%s629 + $0x78] sm:$0xff]
        %v839 = vld [vmem:[%s629 + $0x80] sm:$0xf]
        %v840 = vld [vmem:[%s629 + $0x84] sm:$0xff]
        %v841 = vld [vmem:[%s629 + $0x8c] sm:$0xf]
        %v842 = vld [vmem:[%s629 + $0x90] sm:$0xff]
        %v843 = vld [vmem:[%s629 + $0x98] sm:$0xf]
        %v844 = vld [vmem:[%s629 + $0x9c] sm:$0xff]
        %v845 = vld [vmem:[%s629 + $0xa4] sm:$0xf]
        %v846 = vld [vmem:[%s629 + $0xa8] sm:$0xff]
        %v847 = vld [vmem:[%s629 + $0xb0] sm:$0xf]
        %v848 = vld [vmem:[%s629 + $0xb4] sm:$0xff]
        %v849 = vld [vmem:[%s629 + $0xbc] sm:$0xf]
        %v850 = vld [vmem:[%s744] sm:$0x7]
        %v852 = vlaneseq
        %v853 = vshrl.u32 %v852, 7
        %v854 = vsub.s32 0, %v853
        %v855 = vrot.slane %v850, %v854
        %v856 = vlaneseq
        %v857 = vshrl.u32 %v856, 7
        %v858 = vsub.s32 1, %v857
        %v859 = vrot.slane %v850, %v858
        %v860 = vlaneseq
        %v861 = vshrl.u32 %v860, 7
        %v862 = vsub.s32 2, %v861
        %v863 = vrot.slane %v850, %v862
        %v899 = vunpack.c.l.b16 %v818
        %v900 = vunpack.c.h.b16 %v818
        %v901 = vunpack.c.l.b16 %v819
        %v902 = vunpack.c.l.b16 %v820
        %v903 = vunpack.c.h.b16 %v820
        %v904 = vunpack.c.l.b16 %v821
        %v905 = vunpack.c.l.b16 %v822
        %v906 = vunpack.c.h.b16 %v822
        %v907 = vunpack.c.l.b16 %v823
        %v908 = vunpack.c.l.b16 %v824
        %v909 = vunpack.c.h.b16 %v824
        %v910 = vunpack.c.l.b16 %v825
        %v911 = vunpack.c.l.b16 %v826
        %v912 = vunpack.c.h.b16 %v826
        %v913 = vunpack.c.l.b16 %v827
        %v914 = vunpack.c.l.b16 %v828
        %v915 = vunpack.c.h.b16 %v828
        %v916 = vunpack.c.l.b16 %v829
        %v917 = vunpack.c.l.b16 %v830
        %v918 = vunpack.c.h.b16 %v830
        %v919 = vunpack.c.l.b16 %v831
        %v920 = vunpack.c.l.b16 %v832
        %v921 = vunpack.c.h.b16 %v832
        %v922 = vunpack.c.l.b16 %v833
        %v923 = vunpack.c.l.b16 %v834
        %v924 = vunpack.c.h.b16 %v834
        %v925 = vunpack.c.l.b16 %v835
        %v926 = vunpack.c.l.b16 %v836
        %v927 = vunpack.c.h.b16 %v836
        %v928 = vunpack.c.l.b16 %v837
        %v929 = vunpack.c.l.b16 %v838
        %v930 = vunpack.c.h.b16 %v838
        %v931 = vunpack.c.l.b16 %v839
        %v932 = vunpack.c.l.b16 %v840
        %v933 = vunpack.c.h.b16 %v840
        %v934 = vunpack.c.l.b16 %v841
        %v935 = vunpack.c.l.b16 %v842
        %v936 = vunpack.c.h.b16 %v842
        %v937 = vunpack.c.l.b16 %v843
        %v938 = vunpack.c.l.b16 %v844
        %v939 = vunpack.c.h.b16 %v844
        %v940 = vunpack.c.l.b16 %v845
        %v941 = vunpack.c.l.b16 %v846
        %v942 = vunpack.c.h.b16 %v846
        %v943 = vunpack.c.l.b16 %v847
        %v944 = vunpack.c.l.b16 %v848
        %v945 = vunpack.c.h.b16 %v848
        %v946 = vunpack.c.l.b16 %v849
        %v947 = vpack.c.b16 %v902, %v899
        %v948 = vpack.c.b16 %v903, %v900
        %v949 = vpack.c.b16 %v904, %v901
        %v950 = vpack.c.b16 %v908, %v905
        %v951 = vpack.c.b16 %v909, %v906
        %v952 = vpack.c.b16 %v910, %v907
        %v953 = vpack.c.b16 %v914, %v911
        %v954 = vpack.c.b16 %v915, %v912
        %v955 = vpack.c.b16 %v916, %v913
        %v956 = vpack.c.b16 %v920, %v917
        %v957 = vpack.c.b16 %v921, %v918
        %v958 = vpack.c.b16 %v922, %v919
        %v959 = vpack.c.b16 %v926, %v923
        %v960 = vpack.c.b16 %v927, %v924
        %v961 = vpack.c.b16 %v928, %v925
        %v962 = vpack.c.b16 %v932, %v929
        %v963 = vpack.c.b16 %v933, %v930
        %v964 = vpack.c.b16 %v934, %v931
        %v965 = vpack.c.b16 %v938, %v935
        %v966 = vpack.c.b16 %v939, %v936
        %v967 = vpack.c.b16 %v940, %v937
        %v968 = vpack.c.b16 %v944, %v941
        %v969 = vpack.c.b16 %v945, %v942
        %v970 = vpack.c.b16 %v946, %v943
        %995 = vmatprep.subr.bf16.mxu0 %v948
        %996 = vmatpush1.bf16.msra.mxu0 %v947
        %997 = vmatprep.subr.bf16.mxu0 %v951
        %998 = vmatpush1.bf16.msra.mxu0 %v950
        %999 = vmatprep.subr.bf16.mxu0 %v954
        %1000 = vmatpush1.bf16.msra.mxu0 %v953
        %1001 = vmatprep.subr.bf16.mxu0 %v957
        %1002 = vmatpush1.bf16.msra.mxu0 %v956
        %1003 = vmatprep.subr.bf16.mxu0 %v960
        %1004 = vmatpush1.bf16.msra.mxu0 %v959
        %1005 = vmatprep.subr.bf16.mxu0 %v963
        %1006 = vmatpush1.bf16.msra.mxu0 %v962
        %1007 = vmatprep.subr.bf16.mxu0 %v966
        %1008 = vmatpush1.bf16.msra.mxu0 %v965
        %1009 = vmatprep.subr.bf16.mxu0 %v969
        %1010 = vmatpush1.bf16.msra.mxu0 %v968
        %1011 = vmatprep.subr.bf16.mxu0 0
        %1012 = vmatpush1.bf16.msra.mxu0 0
        %1013 = vmatprep.subr.bf16.mxu0 0
        %1014 = vmatpush1.bf16.msra.mxu0 0
        %1015 = vmatprep.subr.bf16.mxu0 0
        %1016 = vmatpush1.bf16.msra.mxu0 0
        %1017 = vmatprep.subr.bf16.mxu0 0
        %1018 = vmatpush1.bf16.msra.mxu0 0
        %1019 = vmatprep.subr.bf16.mxu0 0
        %1020 = vmatpush1.bf16.msra.mxu0 0
        %1021 = vmatprep.subr.bf16.mxu0 0
        %1022 = vmatpush1.bf16.msra.mxu0 0
        %1023 = vmatprep.subr.bf16.mxu0 0
        %1024 = vmatpush1.bf16.msra.mxu0 0
        %1025 = vmatprep.subr.bf16.mxu0 0
        %1026 = vmatpush1.bf16.msra.mxu0 0
        %1027 = vmatprep.mubr.bf16.mxu0 0
        %1028 = vmatmul.mubr.bf16.gmra.mrb[0].mxu0 %v817
        %v1029 = vpop.f32.mrb[0].mxu0
        %v1030 = vadd.f32 %v855, %v1029
        %v1031 = vpop.f32.mrb[0].mxu0
        %v1032 = vadd.f32 %v859, %v1031
        %v1033 = vpop.f32.mrb[0].mxu0
        %v1034 = vpop.f32.mrb[0].mxu0
        %1035 = vdwg.mxu0
        %1036 = vmatprep.subr.bf16.mxu0 0
        %1037 = vmatpush1.bf16.msra.mxu0 %v949
        %1038 = vmatprep.subr.bf16.mxu0 0
        %1039 = vmatpush1.bf16.msra.mxu0 %v952
        %1040 = vmatprep.subr.bf16.mxu0 0
        %1041 = vmatpush1.bf16.msra.mxu0 %v955
        %1042 = vmatprep.subr.bf16.mxu0 0
        %1043 = vmatpush1.bf16.msra.mxu0 %v958
        %1044 = vmatprep.subr.bf16.mxu0 0
        %1045 = vmatpush1.bf16.msra.mxu0 %v961
        %1046 = vmatprep.subr.bf16.mxu0 0
        %1047 = vmatpush1.bf16.msra.mxu0 %v964
        %1048 = vmatprep.subr.bf16.mxu0 0
        %1049 = vmatpush1.bf16.msra.mxu0 %v967
        %1050 = vmatprep.subr.bf16.mxu0 0
        %1051 = vmatpush1.bf16.msra.mxu0 %v970
        %1052 = vmatprep.subr.bf16.mxu0 0
        %1053 = vmatpush1.bf16.msra.mxu0 0
        %1054 = vmatprep.subr.bf16.mxu0 0
        %1055 = vmatpush1.bf16.msra.mxu0 0
        %1056 = vmatprep.subr.bf16.mxu0 0
        %1057 = vmatpush1.bf16.msra.mxu0 0
        %1058 = vmatprep.subr.bf16.mxu0 0
        %1059 = vmatpush1.bf16.msra.mxu0 0
        %1060 = vmatprep.subr.bf16.mxu0 0
        %1061 = vmatpush1.bf16.msra.mxu0 0
        %1062 = vmatprep.subr.bf16.mxu0 0
        %1063 = vmatpush1.bf16.msra.mxu0 0
        %1064 = vmatprep.subr.bf16.mxu0 0
        %1065 = vmatpush1.bf16.msra.mxu0 0
        %1066 = vmatprep.subr.bf16.mxu0 0
        %1067 = vmatpush1.bf16.msra.mxu0 0
        %1068 = vmatprep.mubr.bf16.mxu0 0
        %1069 = vmatmul.mubr.bf16.gmra.mrb[0].mxu0 %v817
        %v1070 = vpop.f32.mrb[0].mxu0
        %v1071 = vadd.f32 %v863, %v1070
        %v1072 = vpop.f32.mrb[0].mxu0
        %v1073 = vpop.f32.mrb[0].mxu0
        %v1074 = vpop.f32.mrb[0].mxu0
        %1075 = vdwg.mxu0
        %v1076 = vpack.c.bf16 %v1030, %v1030
        %v1077 = vpack.c.bf16 %v1032, %v1032
        %v1078 = vpack.c.bf16 %v1071, %v1071
        %v1079 = vld [vmem:[%s740] sm:$0x1]
        %v1080 = vld [vmem:[%s749] sm:$0xf]
        %v1081 = vld [vmem:[%s749 + $0x4] sm:$0xf]
        %v1082 = vld [vmem:[%s749 + $0x8] sm:$0xf]
        %v1083 = vld [vmem:[%s749 + $0xc] sm:$0xf]
        %v1084 = vld [vmem:[%s749 + $0x10] sm:$0xf]
        %v1085 = vld [vmem:[%s749 + $0x14] sm:$0xf]
        %v1086 = vld [vmem:[%s749 + $0x18] sm:$0xf]
        %v1087 = vld [vmem:[%s749 + $0x1c] sm:$0xf]
        %v1088 = vld [vmem:[%s749 + $0x20] sm:$0xf]
        %v1089 = vld [vmem:[%s749 + $0x24] sm:$0xf]
        %v1090 = vld [vmem:[%s749 + $0x28] sm:$0xf]
        %v1091 = vld [vmem:[%s749 + $0x2c] sm:$0xf]
        %v1092 = vld [vmem:[%s749 + $0x30] sm:$0xf]
        %v1093 = vld [vmem:[%s749 + $0x34] sm:$0xf]
        %v1094 = vld [vmem:[%s749 + $0x38] sm:$0xf]
        %v1095 = vld [vmem:[%s749 + $0x3c] sm:$0xf]
        %v1096 = vld [vmem:[%s752] sm:$0x1]
        %vm1097 = vcmask 523264
        %v1099 = vsel %vm1097, %v1076, 0
        %v1102 = vsel %vm1097, %v1077, 0
        %1104 = vmatprep.subr.bf16.mxu0 0
        %1105 = vmatpush1.bf16.xpose.msra.mxu0 %v1102
        %1106 = vmatprep.subr.bf16.mxu0 0
        %1107 = vmatpush1.bf16.xpose.msra.mxu0 0
        %1108 = vmatprep.subr.bf16.mxu0 0
        %1109 = vmatpush1.bf16.xpose.msra.mxu0 0
        %1110 = vmatprep.subr.bf16.mxu0 0
        %1111 = vmatpush1.bf16.xpose.msra.mxu0 0
        %1112 = vmatprep.subr.bf16.mxu0 0
        %1113 = vmatpush1.bf16.xpose.msra.mxu0 0
        %1114 = vmatprep.subr.bf16.mxu0 0
        %1115 = vmatpush1.bf16.xpose.msra.mxu0 0
        %1116 = vmatprep.subr.bf16.mxu0 0
        %1117 = vmatpush1.bf16.xpose.msra.mxu0 0
        %1118 = vmatprep.subr.bf16.mxu0 0
        %1119 = vmatpush1.bf16.xpose.msra.mxu0 0
        %1120 = vmatprep.subr.bf16.mxu0 0
        %1121 = vmatpush1.bf16.xpose.msra.mxu0 0
        %1122 = vmatprep.subr.bf16.mxu0 0
        %1123 = vmatpush1.bf16.xpose.msra.mxu0 0
        %1124 = vmatprep.subr.bf16.mxu0 0
        %1125 = vmatpush1.bf16.xpose.msra.mxu0 0
        %1126 = vmatprep.subr.bf16.mxu0 0
        %1127 = vmatpush1.bf16.xpose.msra.mxu0 0
        %1128 = vmatprep.subr.bf16.mxu0 0
        %1129 = vmatpush1.bf16.xpose.msra.mxu0 0
        %1130 = vmatprep.subr.bf16.mxu0 0
        %1131 = vmatpush1.bf16.xpose.msra.mxu0 0
        %1132 = vmatprep.subr.bf16.mxu0 0
        %1133 = vmatpush1.bf16.xpose.msra.mxu0 0
        %1134 = vmatprep.subr.bf16.mxu0 0
        %1135 = vmatpush1.bf16.xpose.msra.mxu0 0
        %1136 = vmatprep.mubr.bf16.mxu0 0
        %1137 = vmatmul.mubr.bf16.gmra.mrb[0].mxu0 %v1099
        %v1138 = vpop.f32.mrb[0].mxu0
        %v1139 = vadd.f32 0.0, %v1138
        %v1140 = vpop.f32.mrb[0].mxu0
        %v1141 = vpop.f32.mrb[0].mxu0
        %v1142 = vpop.f32.mrb[0].mxu0
        %1143 = vdwg.mxu0
        %v1144 = vmul.f32 %v1139, 0.125
        %v1146 = vlaneseq
        %v1147 = vshrl.u32 %v1146, 7
        %v1148 = vsub.s32 0, %v1147
        %v1149 = vrot.slane %v1079, %v1148
        %v1151 = vadd.f32 %v1144, %v1149
        %vm1152 = vcmask 64512
        %v1153 = vsel %vm1152, %v1151, -inf
        %1154 = vmax.xlane.f32.xlu0 %v1153
        %v1155 = vpop.xlane.xlu0 %1154
        %v1156 = vsub.f32 %v1151, %v1155
        %v1157 = vmul.f32 %v1156, 1.442695
        %v1158 = vpow.pop %v1157
        %v1159 = vsel %vm1152, %v1158, 0.0
        %1160 = vadd.xlane.f32.xlu0 %v1159
        %v1161 = vpop.xlane.xlu0 %1160
        %v1162 = vrcp.pop %v1161
        %v1163 = vmul.f32 %v1158, %v1162
        %v1164 = vpack.c.bf16 %v1163, %v1163
        %v1166 = vsel %vm1152, %v1164, 0
        %vm1168 = vcmask 1043456
        %v1170 = vsel %vm1168, %v1078, 0
        %1172 = vmatprep.subr.bf16.mxu0 0
        %1173 = vmatpush1.bf16.msra.mxu0 %v1170
        %1174 = vmatprep.subr.bf16.mxu0 0
        %1175 = vmatpush1.bf16.msra.mxu0 0
        %1176 = vmatprep.subr.bf16.mxu0 0
        %1177 = vmatpush1.bf16.msra.mxu0 0
        %1178 = vmatprep.subr.bf16.mxu0 0
        %1179 = vmatpush1.bf16.msra.mxu0 0
        %1180 = vmatprep.subr.bf16.mxu0 0
        %1181 = vmatpush1.bf16.msra.mxu0 0
        %1182 = vmatprep.subr.bf16.mxu0 0
        %1183 = vmatpush1.bf16.msra.mxu0 0
        %1184 = vmatprep.subr.bf16.mxu0 0
        %1185 = vmatpush1.bf16.msra.mxu0 0
        %1186 = vmatprep.subr.bf16.mxu0 0
        %1187 = vmatpush1.bf16.msra.mxu0 0
        %1188 = vmatprep.subr.bf16.mxu0 0
        %1189 = vmatpush1.bf16.msra.mxu0 0
        %1190 = vmatprep.subr.bf16.mxu0 0
        %1191 = vmatpush1.bf16.msra.mxu0 0
        %1192 = vmatprep.subr.bf16.mxu0 0
        %1193 = vmatpush1.bf16.msra.mxu0 0
        %1194 = vmatprep.subr.bf16.mxu0 0
        %1195 = vmatpush1.bf16.msra.mxu0 0
        %1196 = vmatprep.subr.bf16.mxu0 0
        %1197 = vmatpush1.bf16.msra.mxu0 0
        %1198 = vmatprep.subr.bf16.mxu0 0
        %1199 = vmatpush1.bf16.msra.mxu0 0
        %1200 = vmatprep.subr.bf16.mxu0 0
        %1201 = vmatpush1.bf16.msra.mxu0 0
        %1202 = vmatprep.subr.bf16.mxu0 0
        %1203 = vmatpush1.bf16.msra.mxu0 0
        %1204 = vmatprep.mubr.bf16.mxu0 0
        %1205 = vmatmul.mubr.bf16.gmra.mrb[0].mxu0 %v1166
        %v1206 = vpop.f32.mrb[0].mxu0
        %v1207 = vadd.f32 0.0, %v1206
        %v1208 = vpop.f32.mrb[0].mxu0
        %v1209 = vpop.f32.mrb[0].mxu0
        %v1210 = vpop.f32.mrb[0].mxu0
        %1211 = vdwg.mxu0
        %v1212 = vpack.c.bf16 %v1207, %v1207
        %v1221 = vunpack.c.l.b16 %v1080
        %v1222 = vunpack.c.l.b16 %v1081
        %v1223 = vunpack.c.l.b16 %v1082
        %v1224 = vunpack.c.l.b16 %v1083
        %v1225 = vunpack.c.l.b16 %v1084
        %v1226 = vunpack.c.l.b16 %v1085
        %v1227 = vunpack.c.l.b16 %v1086
        %v1228 = vunpack.c.l.b16 %v1087
        %v1229 = vpack.c.b16 %v1222, %v1221
        %v1230 = vpack.c.b16 %v1224, %v1223
        %v1231 = vpack.c.b16 %v1226, %v1225
        %v1232 = vpack.c.b16 %v1228, %v1227
        %v1238 = vsel %vm1097, %v1212, 0
        %1240 = vmatprep.subr.bf16.mxu0 0
        %1241 = vmatpush1.bf16.msra.mxu0 %v1229
        %1242 = vmatprep.subr.bf16.mxu0 0
        %1243 = vmatpush1.bf16.msra.mxu0 %v1230
        %1244 = vmatprep.subr.bf16.mxu0 0
        %1245 = vmatpush1.bf16.msra.mxu0 %v1231
        %1246 = vmatprep.subr.bf16.mxu0 0
        %1247 = vmatpush1.bf16.msra.mxu0 %v1232
        %1248 = vmatprep.subr.bf16.mxu0 0
        %1249 = vmatpush1.bf16.msra.mxu0 0
        %1250 = vmatprep.subr.bf16.mxu0 0
        %1251 = vmatpush1.bf16.msra.mxu0 0
        %1252 = vmatprep.subr.bf16.mxu0 0
        %1253 = vmatpush1.bf16.msra.mxu0 0
        %1254 = vmatprep.subr.bf16.mxu0 0
        %1255 = vmatpush1.bf16.msra.mxu0 0
        %1256 = vmatprep.subr.bf16.mxu0 0
        %1257 = vmatpush1.bf16.msra.mxu0 0
        %1258 = vmatprep.subr.bf16.mxu0 0
        %1259 = vmatpush1.bf16.msra.mxu0 0
        %1260 = vmatprep.subr.bf16.mxu0 0
        %1261 = vmatpush1.bf16.msra.mxu0 0
        %1262 = vmatprep.subr.bf16.mxu0 0
        %1263 = vmatpush1.bf16.msra.mxu0 0
        %1264 = vmatprep.subr.bf16.mxu0 0
        %1265 = vmatpush1.bf16.msra.mxu0 0
        %1266 = vmatprep.subr.bf16.mxu0 0
        %1267 = vmatpush1.bf16.msra.mxu0 0
        %1268 = vmatprep.subr.bf16.mxu0 0
        %1269 = vmatpush1.bf16.msra.mxu0 0
        %1270 = vmatprep.subr.bf16.mxu0 0
        %1271 = vmatpush1.bf16.msra.mxu0 0
        %1272 = vmatprep.mubr.bf16.mxu0 0
        %1273 = vmatmul.mubr.bf16.gmra.mrb[0].mxu0 %v1238
        %v1274 = vpop.f32.mrb[0].mxu0
        %v1275 = vadd.f32 0.0, %v1274
        %v1276 = vpop.f32.mrb[0].mxu0
        %v1277 = vpop.f32.mrb[0].mxu0
        %v1278 = vpop.f32.mrb[0].mxu0
        %1279 = vdwg.mxu0
        %v1281 = vlaneseq
        %v1282 = vshrl.u32 %v1281, 7
        %v1283 = vsub.s32 0, %v1282
        %v1284 = vrot.slane %v1096, %v1283
        %v1286 = vadd.f32 %v1284, %v1275
        %1288 = vrot.lane.b32.xlu0 %v1076, 64
        %v1289 = vpop.permute.xlu0 %1288
        %1291 = vrot.lane.b32.xlu0 %v1077, 64
        %v1292 = vpop.permute.xlu0 %1291
        %v1294 = vsel %vm1097, %v1289, 0
        %v1297 = vsel %vm1097, %v1292, 0
        %1299 = vmatprep.subr.bf16.mxu0 0
        %1300 = vmatpush1.bf16.xpose.msra.mxu0 %v1297
        %1301 = vmatprep.subr.bf16.mxu0 0
        %1302 = vmatpush1.bf16.xpose.msra.mxu0 0
        %1303 = vmatprep.subr.bf16.mxu0 0
        %1304 = vmatpush1.bf16.xpose.msra.mxu0 0
        %1305 = vmatprep.subr.bf16.mxu0 0
        %1306 = vmatpush1.bf16.xpose.msra.mxu0 0
        %1307 = vmatprep.subr.bf16.mxu0 0
        %1308 = vmatpush1.bf16.xpose.msra.mxu0 0
        %1309 = vmatprep.subr.bf16.mxu0 0
        %1310 = vmatpush1.bf16.xpose.msra.mxu0 0
        %1311 = vmatprep.subr.bf16.mxu0 0
        %1312 = vmatpush1.bf16.xpose.msra.mxu0 0
        %1313 = vmatprep.subr.bf16.mxu0 0
        %1314 = vmatpush1.bf16.xpose.msra.mxu0 0
        %1315 = vmatprep.subr.bf16.mxu0 0
        %1316 = vmatpush1.bf16.xpose.msra.mxu0 0
        %1317 = vmatprep.subr.bf16.mxu0 0
        %1318 = vmatpush1.bf16.xpose.msra.mxu0 0
        %1319 = vmatprep.subr.bf16.mxu0 0
        %1320 = vmatpush1.bf16.xpose.msra.mxu0 0
        %1321 = vmatprep.subr.bf16.mxu0 0
        %1322 = vmatpush1.bf16.xpose.msra.mxu0 0
        %1323 = vmatprep.subr.bf16.mxu0 0
        %1324 = vmatpush1.bf16.xpose.msra.mxu0 0
        %1325 = vmatprep.subr.bf16.mxu0 0
        %1326 = vmatpush1.bf16.xpose.msra.mxu0 0
        %1327 = vmatprep.subr.bf16.mxu0 0
        %1328 = vmatpush1.bf16.xpose.msra.mxu0 0
        %1329 = vmatprep.subr.bf16.mxu0 0
        %1330 = vmatpush1.bf16.xpose.msra.mxu0 0
        %1331 = vmatprep.mubr.bf16.mxu0 0
        %1332 = vmatmul.mubr.bf16.gmra.mrb[0].mxu0 %v1294
        %v1333 = vpop.f32.mrb[0].mxu0
        %v1334 = vadd.f32 0.0, %v1333
        %v1335 = vpop.f32.mrb[0].mxu0
        %v1336 = vpop.f32.mrb[0].mxu0
        %v1337 = vpop.f32.mrb[0].mxu0
        %1338 = vdwg.mxu0
        %v1339 = vmul.f32 %v1334, 0.125
        %v1340 = vadd.f32 %v1339, %v1149
        %v1341 = vsel %vm1152, %v1340, -inf
        %1342 = vmax.xlane.f32.xlu0 %v1341
        %v1343 = vpop.xlane.xlu0 %1342
        %v1344 = vsub.f32 %v1340, %v1343
        %v1345 = vmul.f32 %v1344, 1.442695
        %v1346 = vpow.pop %v1345
        %v1347 = vsel %vm1152, %v1346, 0.0
        %1348 = vadd.xlane.f32.xlu0 %v1347
        %v1349 = vpop.xlane.xlu0 %1348
        %v1350 = vrcp.pop %v1349
        %v1351 = vmul.f32 %v1346, %v1350
        %v1352 = vpack.c.bf16 %v1351, %v1351
        %1354 = vrot.lane.b32.xlu0 %v1078, 64
        %v1355 = vpop.permute.xlu0 %1354
        %v1357 = vsel %vm1152, %v1352, 0
        %v1360 = vsel %vm1168, %v1355, 0
        %1362 = vmatprep.subr.bf16.mxu0 0
        %1363 = vmatpush1.bf16.msra.mxu0 %v1360
        %1364 = vmatprep.subr.bf16.mxu0 0
        %1365 = vmatpush1.bf16.msra.mxu0 0
        %1366 = vmatprep.subr.bf16.mxu0 0
        %1367 = vmatpush1.bf16.msra.mxu0 0
        %1368 = vmatprep.subr.bf16.mxu0 0
        %1369 = vmatpush1.bf16.msra.mxu0 0
        %1370 = vmatprep.subr.bf16.mxu0 0
        %1371 = vmatpush1.bf16.msra.mxu0 0
        %1372 = vmatprep.subr.bf16.mxu0 0
        %1373 = vmatpush1.bf16.msra.mxu0 0
        %1374 = vmatprep.subr.bf16.mxu0 0
        %1375 = vmatpush1.bf16.msra.mxu0 0
        %1376 = vmatprep.subr.bf16.mxu0 0
        %1377 = vmatpush1.bf16.msra.mxu0 0
        %1378 = vmatprep.subr.bf16.mxu0 0
        %1379 = vmatpush1.bf16.msra.mxu0 0
        %1380 = vmatprep.subr.bf16.mxu0 0
        %1381 = vmatpush1.bf16.msra.mxu0 0
        %1382 = vmatprep.subr.bf16.mxu0 0
        %1383 = vmatpush1.bf16.msra.mxu0 0
        %1384 = vmatprep.subr.bf16.mxu0 0
        %1385 = vmatpush1.bf16.msra.mxu0 0
        %1386 = vmatprep.subr.bf16.mxu0 0
        %1387 = vmatpush1.bf16.msra.mxu0 0
        %1388 = vmatprep.subr.bf16.mxu0 0
        %1389 = vmatpush1.bf16.msra.mxu0 0
        %1390 = vmatprep.subr.bf16.mxu0 0
        %1391 = vmatpush1.bf16.msra.mxu0 0
        %1392 = vmatprep.subr.bf16.mxu0 0
        %1393 = vmatpush1.bf16.msra.mxu0 0
        %1394 = vmatprep.mubr.bf16.mxu0 0
        %1395 = vmatmul.mubr.bf16.gmra.mrb[0].mxu0 %v1357
        %v1396 = vpop.f32.mrb[0].mxu0
        %v1397 = vadd.f32 0.0, %v1396
        %v1398 = vpop.f32.mrb[0].mxu0
        %v1399 = vpop.f32.mrb[0].mxu0
        %v1400 = vpop.f32.mrb[0].mxu0
        %1401 = vdwg.mxu0
        %v1402 = vpack.c.bf16 %v1397, %v1397
        %v1411 = vunpack.c.l.b16 %v1088
        %v1412 = vunpack.c.l.b16 %v1089
        %v1413 = vunpack.c.l.b16 %v1090
        %v1414 = vunpack.c.l.b16 %v1091
        %v1415 = vunpack.c.l.b16 %v1092
        %v1416 = vunpack.c.l.b16 %v1093
        %v1417 = vunpack.c.l.b16 %v1094
        %v1418 = vunpack.c.l.b16 %v1095
        %v1419 = vpack.c.b16 %v1412, %v1411
        %v1420 = vpack.c.b16 %v1414, %v1413
        %v1421 = vpack.c.b16 %v1416, %v1415
        %v1422 = vpack.c.b16 %v1418, %v1417
        %v1428 = vsel %vm1097, %v1402, 0
        %1430 = vmatprep.subr.bf16.mxu0 0
        %1431 = vmatpush1.bf16.msra.mxu0 %v1419
        %1432 = vmatprep.subr.bf16.mxu0 0
        %1433 = vmatpush1.bf16.msra.mxu0 %v1420
        %1434 = vmatprep.subr.bf16.mxu0 0
        %1435 = vmatpush1.bf16.msra.mxu0 %v1421
        %1436 = vmatprep.subr.bf16.mxu0 0
        %1437 = vmatpush1.bf16.msra.mxu0 %v1422
        %1438 = vmatprep.subr.bf16.mxu0 0
        %1439 = vmatpush1.bf16.msra.mxu0 0
        %1440 = vmatprep.subr.bf16.mxu0 0
        %1441 = vmatpush1.bf16.msra.mxu0 0
        %1442 = vmatprep.subr.bf16.mxu0 0
        %1443 = vmatpush1.bf16.msra.mxu0 0
        %1444 = vmatprep.subr.bf16.mxu0 0
        %1445 = vmatpush1.bf16.msra.mxu0 0
        %1446 = vmatprep.subr.bf16.mxu0 0
        %1447 = vmatpush1.bf16.msra.mxu0 0
        %1448 = vmatprep.subr.bf16.mxu0 0
        %1449 = vmatpush1.bf16.msra.mxu0 0
        %1450 = vmatprep.subr.bf16.mxu0 0
        %1451 = vmatpush1.bf16.msra.mxu0 0
        %1452 = vmatprep.subr.bf16.mxu0 0
        %1453 = vmatpush1.bf16.msra.mxu0 0
        %1454 = vmatprep.subr.bf16.mxu0 0
        %1455 = vmatpush1.bf16.msra.mxu0 0
        %1456 = vmatprep.subr.bf16.mxu0 0
        %1457 = vmatpush1.bf16.msra.mxu0 0
        %1458 = vmatprep.subr.bf16.mxu0 0
        %1459 = vmatpush1.bf16.msra.mxu0 0
        %1460 = vmatprep.subr.bf16.mxu0 0
        %1461 = vmatpush1.bf16.msra.mxu0 0
        %1462 = vmatprep.mubr.bf16.mxu0 0
        %1463 = vmatmul.mubr.bf16.gmra.mrb[0].mxu0 %v1428
        %v1464 = vpop.f32.mrb[0].mxu0
        %v1465 = vadd.f32 0.0, %v1464
        %v1466 = vpop.f32.mrb[0].mxu0
        %v1467 = vpop.f32.mrb[0].mxu0
        %v1468 = vpop.f32.mrb[0].mxu0
        %1469 = vdwg.mxu0
        %v1470 = vadd.f32 %v1286, %v1465
        %v1471 = vadd.f32 %v1470, %v816
        %v1472 = vld [vmem:[%s755] sm:$0x1]
        %v1473 = vld [vmem:[%s758] sm:$0x1]
        %1474 = vadd.xlane.f32.xlu0 %v1471
        %v1475 = vpop.xlane.xlu0 %1474
        %v1476 = vrcp.pop 128.0
        %v1477 = vmul.f32 %v1475, %v1476
        %v1478 = vsub.f32 %v1471, %v1477
        %v1479 = vmul.f32 %v1478, %v1478
        %1480 = vadd.xlane.f32.xlu0 %v1479
        %v1481 = vpop.xlane.xlu0 %1480
        %v1482 = vmul.f32 %v1481, %v1476
        %v1483 = vadd.f32 %v1482, 1e-05
        %v1484 = vrsqrt.pop %v1483
        %v1485 = vmul.f32 %v1478, %v1484
        %v1487 = vlaneseq
        %v1488 = vshrl.u32 %v1487, 7
        %v1489 = vsub.s32 0, %v1488
        %v1490 = vrot.slane %v1472, %v1489
        %v1492 = vmul.f32 %v1485, %v1490
        %v1494 = vlaneseq
        %v1495 = vshrl.u32 %v1494, 7
        %v1496 = vsub.s32 0, %v1495
        %v1497 = vrot.slane %v1473, %v1496
        %v1499 = vadd.f32 %v1492, %v1497
        %v1500 = vpack.c.bf16 %v1499, %v1499
        %v1501 = vld [vmem:[%s763] sm:$0xff]
        %v1502 = vld [vmem:[%s763 + $0x8] sm:$0xff]
        %v1503 = vld [vmem:[%s763 + $0x10] sm:$0xff]
        %v1504 = vld [vmem:[%s763 + $0x18] sm:$0xff]
        %v1505 = vld [vmem:[%s763 + $0x20] sm:$0xff]
        %v1506 = vld [vmem:[%s763 + $0x28] sm:$0xff]
        %v1507 = vld [vmem:[%s763 + $0x30] sm:$0xff]
        %v1508 = vld [vmem:[%s763 + $0x38] sm:$0xff]
        %v1509 = vld [vmem:[%s763 + $0x40] sm:$0xff]
        %v1510 = vld [vmem:[%s763 + $0x48] sm:$0xff]
        %v1511 = vld [vmem:[%s763 + $0x50] sm:$0xff]
        %v1512 = vld [vmem:[%s763 + $0x58] sm:$0xff]
        %v1513 = vld [vmem:[%s763 + $0x60] sm:$0xff]
        %v1514 = vld [vmem:[%s763 + $0x68] sm:$0xff]
        %v1515 = vld [vmem:[%s763 + $0x70] sm:$0xff]
        %v1516 = vld [vmem:[%s763 + $0x78] sm:$0xff]
        %v1517 = vld [vmem:[%s767] sm:$0x3]
        %v1519 = vlaneseq
        %v1520 = vshrl.u32 %v1519, 7
        %v1521 = vsub.s32 0, %v1520
        %v1522 = vrot.slane %v1517, %v1521
        %v1523 = vlaneseq
        %v1524 = vshrl.u32 %v1523, 7
        %v1525 = vsub.s32 1, %v1524
        %v1526 = vrot.slane %v1517, %v1525
        %v1545 = vunpack.c.l.b16 %v1501
        %v1546 = vunpack.c.h.b16 %v1501
        %v1547 = vunpack.c.l.b16 %v1502
        %v1548 = vunpack.c.h.b16 %v1502
        %v1549 = vunpack.c.l.b16 %v1503
        %v1550 = vunpack.c.h.b16 %v1503
        %v1551 = vunpack.c.l.b16 %v1504
        %v1552 = vunpack.c.h.b16 %v1504
        %v1553 = vunpack.c.l.b16 %v1505
        %v1554 = vunpack.c.h.b16 %v1505
        %v1555 = vunpack.c.l.b16 %v1506
        %v1556 = vunpack.c.h.b16 %v1506
        %v1557 = vunpack.c.l.b16 %v1507
        %v1558 = vunpack.c.h.b16 %v1507
        %v1559 = vunpack.c.l.b16 %v1508
        %v1560 = vunpack.c.h.b16 %v1508
        %v1561 = vunpack.c.l.b16 %v1509
        %v1562 = vunpack.c.h.b16 %v1509
        %v1563 = vunpack.c.l.b16 %v1510
        %v1564 = vunpack.c.h.b16 %v1510
        %v1565 = vunpack.c.l.b16 %v1511
        %v1566 = vunpack.c.h.b16 %v1511
        %v1567 = vunpack.c.l.b16 %v1512
        %v1568 = vunpack.c.h.b16 %v1512
        %v1569 = vunpack.c.l.b16 %v1513
        %v1570 = vunpack.c.h.b16 %v1513
        %v1571 = vunpack.c.l.b16 %v1514
        %v1572 = vunpack.c.h.b16 %v1514
        %v1573 = vunpack.c.l.b16 %v1515
        %v1574 = vunpack.c.h.b16 %v1515
        %v1575 = vunpack.c.l.b16 %v1516
        %v1576 = vunpack.c.h.b16 %v1516
        %v1577 = vpack.c.b16 %v1547, %v1545
        %v1578 = vpack.c.b16 %v1548, %v1546
        %v1579 = vpack.c.b16 %v1551, %v1549
        %v1580 = vpack.c.b16 %v1552, %v1550
        %v1581 = vpack.c.b16 %v1555, %v1553
        %v1582 = vpack.c.b16 %v1556, %v1554
        %v1583 = vpack.c.b16 %v1559, %v1557
        %v1584 = vpack.c.b16 %v1560, %v1558
        %v1585 = vpack.c.b16 %v1563, %v1561
        %v1586 = vpack.c.b16 %v1564, %v1562
        %v1587 = vpack.c.b16 %v1567, %v1565
        %v1588 = vpack.c.b16 %v1568, %v1566
        %v1589 = vpack.c.b16 %v1571, %v1569
        %v1590 = vpack.c.b16 %v1572, %v1570
        %v1591 = vpack.c.b16 %v1575, %v1573
        %v1592 = vpack.c.b16 %v1576, %v1574
        %1609 = vmatprep.subr.bf16.mxu0 %v1578
        %1610 = vmatpush1.bf16.msra.mxu0 %v1577
        %1611 = vmatprep.subr.bf16.mxu0 %v1580
        %1612 = vmatpush1.bf16.msra.mxu0 %v1579
        %1613 = vmatprep.subr.bf16.mxu0 %v1582
        %1614 = vmatpush1.bf16.msra.mxu0 %v1581
        %1615 = vmatprep.subr.bf16.mxu0 %v1584
        %1616 = vmatpush1.bf16.msra.mxu0 %v1583
        %1617 = vmatprep.subr.bf16.mxu0 %v1586
        %1618 = vmatpush1.bf16.msra.mxu0 %v1585
        %1619 = vmatprep.subr.bf16.mxu0 %v1588
        %1620 = vmatpush1.bf16.msra.mxu0 %v1587
        %1621 = vmatprep.subr.bf16.mxu0 %v1590
        %1622 = vmatpush1.bf16.msra.mxu0 %v1589
        %1623 = vmatprep.subr.bf16.mxu0 %v1592
        %1624 = vmatpush1.bf16.msra.mxu0 %v1591
        %1625 = vmatprep.subr.bf16.mxu0 0
        %1626 = vmatpush1.bf16.msra.mxu0 0
        %1627 = vmatprep.subr.bf16.mxu0 0
        %1628 = vmatpush1.bf16.msra.mxu0 0
        %1629 = vmatprep.subr.bf16.mxu0 0
        %1630 = vmatpush1.bf16.msra.mxu0 0
        %1631 = vmatprep.subr.bf16.mxu0 0
        %1632 = vmatpush1.bf16.msra.mxu0 0
        %1633 = vmatprep.subr.bf16.mxu0 0
        %1634 = vmatpush1.bf16.msra.mxu0 0
        %1635 = vmatprep.subr.bf16.mxu0 0
        %1636 = vmatpush1.bf16.msra.mxu0 0
        %1637 = vmatprep.subr.bf16.mxu0 0
        %1638 = vmatpush1.bf16.msra.mxu0 0
        %1639 = vmatprep.subr.bf16.mxu0 0
        %1640 = vmatpush1.bf16.msra.mxu0 0
        %1641 = vmatprep.mubr.bf16.mxu0 0
        %1642 = vmatmul.mubr.bf16.gmra.mrb[0].mxu0 %v1500
        %v1643 = vpop.f32.mrb[0].mxu0
        %v1644 = vadd.f32 %v1522, %v1643
        %v1645 = vpop.f32.mrb[0].mxu0
        %v1646 = vadd.f32 %v1526, %v1645
        %v1647 = vpop.f32.mrb[0].mxu0
        %v1648 = vpop.f32.mrb[0].mxu0
        %1649 = vdwg.mxu0
        %v1650 = vmul.f32 %v1644, %v1644
        %v1651 = vmul.f32 %v1646, %v1646
        %v1652 = vmul.f32 %v1644, %v1650
        %v1653 = vmul.f32 %v1646, %v1651
        %v1654 = vmul.f32 %v1652, 0.044715
        %v1655 = vmul.f32 %v1653, 0.044715
        %v1656 = vadd.f32 %v1644, %v1654
        %v1657 = vadd.f32 %v1646, %v1655
        %v1658 = vmul.f32 %v1656, 0.7978846
        %v1659 = vmul.f32 %v1657, 0.7978846
        %v1660 = vtanh.pop %v1658
        %v1661 = vtanh.pop %v1659
        %v1662 = vadd.f32 %v1660, 1.0
        %v1663 = vadd.f32 %v1661, 1.0
        %v1664 = vmul.f32 %v1662, 0.5
        %v1665 = vmul.f32 %v1663, 0.5
        %v1666 = vmul.f32 %v1644, %v1664
        %v1667 = vmul.f32 %v1646, %v1665
        %v1668 = vpack.c.bf16 %v1666, %v1666
        %v1669 = vpack.c.bf16 %v1667, %v1667
        %v1670 = vld [vmem:[%s638] sm:$0xf]
        %v1671 = vld [vmem:[%s638 + $0x4] sm:$0xf]
        %v1672 = vld [vmem:[%s638 + $0x8] sm:$0xf]
        %v1673 = vld [vmem:[%s638 + $0xc] sm:$0xf]
        %v1674 = vld [vmem:[%s638 + $0x10] sm:$0xf]
        %v1675 = vld [vmem:[%s638 + $0x14] sm:$0xf]
        %v1676 = vld [vmem:[%s638 + $0x18] sm:$0xf]
        %v1677 = vld [vmem:[%s638 + $0x1c] sm:$0xf]
        %v1678 = vld [vmem:[%s638 + $0x20] sm:$0xf]
        %v1679 = vld [vmem:[%s638 + $0x24] sm:$0xf]
        %v1680 = vld [vmem:[%s638 + $0x28] sm:$0xf]
        %v1681 = vld [vmem:[%s638 + $0x2c] sm:$0xf]
        %v1682 = vld [vmem:[%s638 + $0x30] sm:$0xf]
        %v1683 = vld [vmem:[%s638 + $0x34] sm:$0xf]
        %v1684 = vld [vmem:[%s638 + $0x38] sm:$0xf]
        %v1685 = vld [vmem:[%s638 + $0x3c] sm:$0xf]
        %v1686 = vld [vmem:[%s638 + $0x40] sm:$0xf]
        %v1687 = vld [vmem:[%s638 + $0x44] sm:$0xf]
        %v1688 = vld [vmem:[%s638 + $0x48] sm:$0xf]
        %v1689 = vld [vmem:[%s638 + $0x4c] sm:$0xf]
        %v1690 = vld [vmem:[%s638 + $0x50] sm:$0xf]
        %v1691 = vld [vmem:[%s638 + $0x54] sm:$0xf]
        %v1692 = vld [vmem:[%s638 + $0x58] sm:$0xf]
        %v1693 = vld [vmem:[%s638 + $0x5c] sm:$0xf]
        %v1694 = vld [vmem:[%s638 + $0x60] sm:$0xf]
        %v1695 = vld [vmem:[%s638 + $0x64] sm:$0xf]
        %v1696 = vld [vmem:[%s638 + $0x68] sm:$0xf]
        %v1697 = vld [vmem:[%s638 + $0x6c] sm:$0xf]
        %v1698 = vld [vmem:[%s638 + $0x70] sm:$0xf]
        %v1699 = vld [vmem:[%s638 + $0x74] sm:$0xf]
        %v1700 = vld [vmem:[%s638 + $0x78] sm:$0xf]
        %v1701 = vld [vmem:[%s638 + $0x7c] sm:$0xf]
        %v1702 = vld [vmem:[%s770] sm:$0x1]
        %v1704 = vlaneseq
        %v1705 = vshrl.u32 %v1704, 7
        %v1706 = vsub.s32 0, %v1705
        %v1707 = vrot.slane %v1702, %v1706
        %v1741 = vunpack.c.l.b16 %v1670
        %v1742 = vunpack.c.l.b16 %v1671
        %v1743 = vunpack.c.l.b16 %v1672
        %v1744 = vunpack.c.l.b16 %v1673
        %v1745 = vunpack.c.l.b16 %v1674
        %v1746 = vunpack.c.l.b16 %v1675
        %v1747 = vunpack.c.l.b16 %v1676
        %v1748 = vunpack.c.l.b16 %v1677
        %v1749 = vunpack.c.l.b16 %v1678
        %v1750 = vunpack.c.l.b16 %v1679
        %v1751 = vunpack.c.l.b16 %v1680
        %v1752 = vunpack.c.l.b16 %v1681
        %v1753 = vunpack.c.l.b16 %v1682
        %v1754 = vunpack.c.l.b16 %v1683
        %v1755 = vunpack.c.l.b16 %v1684
        %v1756 = vunpack.c.l.b16 %v1685
        %v1757 = vunpack.c.l.b16 %v1686
        %v1758 = vunpack.c.l.b16 %v1687
        %v1759 = vunpack.c.l.b16 %v1688
        %v1760 = vunpack.c.l.b16 %v1689
        %v1761 = vunpack.c.l.b16 %v1690
        %v1762 = vunpack.c.l.b16 %v1691
        %v1763 = vunpack.c.l.b16 %v1692
        %v1764 = vunpack.c.l.b16 %v1693
        %v1765 = vunpack.c.l.b16 %v1694
        %v1766 = vunpack.c.l.b16 %v1695
        %v1767 = vunpack.c.l.b16 %v1696
        %v1768 = vunpack.c.l.b16 %v1697
        %v1769 = vunpack.c.l.b16 %v1698
        %v1770 = vunpack.c.l.b16 %v1699
        %v1771 = vunpack.c.l.b16 %v1700
        %v1772 = vunpack.c.l.b16 %v1701
        %v1773 = vpack.c.b16 %v1742, %v1741
        %v1774 = vpack.c.b16 %v1744, %v1743
        %v1775 = vpack.c.b16 %v1746, %v1745
        %v1776 = vpack.c.b16 %v1748, %v1747
        %v1777 = vpack.c.b16 %v1750, %v1749
        %v1778 = vpack.c.b16 %v1752, %v1751
        %v1779 = vpack.c.b16 %v1754, %v1753
        %v1780 = vpack.c.b16 %v1756, %v1755
        %v1781 = vpack.c.b16 %v1758, %v1757
        %v1782 = vpack.c.b16 %v1760, %v1759
        %v1783 = vpack.c.b16 %v1762, %v1761
        %v1784 = vpack.c.b16 %v1764, %v1763
        %v1785 = vpack.c.b16 %v1766, %v1765
        %v1786 = vpack.c.b16 %v1768, %v1767
        %v1787 = vpack.c.b16 %v1770, %v1769
        %v1788 = vpack.c.b16 %v1772, %v1771
        %1805 = vmatprep.subr.bf16.mxu0 0
        %1806 = vmatpush1.bf16.msra.mxu0 %v1773
        %1807 = vmatprep.subr.bf16.mxu0 0
        %1808 = vmatpush1.bf16.msra.mxu0 %v1774
        %1809 = vmatprep.subr.bf16.mxu0 0
        %1810 = vmatpush1.bf16.msra.mxu0 %v1775
        %1811 = vmatprep.subr.bf16.mxu0 0
        %1812 = vmatpush1.bf16.msra.mxu0 %v1776
        %1813 = vmatprep.subr.bf16.mxu0 0
        %1814 = vmatpush1.bf16.msra.mxu0 %v1777
        %1815 = vmatprep.subr.bf16.mxu0 0
        %1816 = vmatpush1.bf16.msra.mxu0 %v1778
        %1817 = vmatprep.subr.bf16.mxu0 0
        %1818 = vmatpush1.bf16.msra.mxu0 %v1779
        %1819 = vmatprep.subr.bf16.mxu0 0
        %1820 = vmatpush1.bf16.msra.mxu0 %v1780
        %1821 = vmatprep.subr.bf16.mxu0 0
        %1822 = vmatpush1.bf16.msra.mxu0 %v1781
        %1823 = vmatprep.subr.bf16.mxu0 0
        %1824 = vmatpush1.bf16.msra.mxu0 %v1782
        %1825 = vmatprep.subr.bf16.mxu0 0
        %1826 = vmatpush1.bf16.msra.mxu0 %v1783
        %1827 = vmatprep.subr.bf16.mxu0 0
        %1828 = vmatpush1.bf16.msra.mxu0 %v1784
        %1829 = vmatprep.subr.bf16.mxu0 0
        %1830 = vmatpush1.bf16.msra.mxu0 %v1785
        %1831 = vmatprep.subr.bf16.mxu0 0
        %1832 = vmatpush1.bf16.msra.mxu0 %v1786
        %1833 = vmatprep.subr.bf16.mxu0 0
        %1834 = vmatpush1.bf16.msra.mxu0 %v1787
        %1835 = vmatprep.subr.bf16.mxu0 0
        %1836 = vmatpush1.bf16.msra.mxu0 %v1788
        %1837 = vmatprep.mubr.bf16.mxu0 %v1669
        %1838 = vmatmul.mubr.bf16.gmra.mrb[0].mxu0 %v1668
        %v1839 = vpop.f32.mrb[0].mxu0
        %v1840 = vadd.f32 %v1707, %v1839
        %v1841 = vpop.f32.mrb[0].mxu0
        %v1842 = vpop.f32.mrb[0].mxu0
        %v1843 = vpop.f32.mrb[0].mxu0
        %1844 = vdwg.mxu0
        %v1845 = vadd.f32 %v1840, %v1499
        %v1846 = vld [vmem:[%s773] sm:$0x1]
        %v1847 = vld [vmem:[%s776] sm:$0x1]
        %1848 = vadd.xlane.f32.xlu0 %v1845
        %v1849 = vpop.xlane.xlu0 %1848
        %v1850 = vmul.f32 %v1849, %v1476
        %v1851 = vsub.f32 %v1845, %v1850
        %v1852 = vmul.f32 %v1851, %v1851
        %1853 = vadd.xlane.f32.xlu0 %v1852
        %v1854 = vpop.xlane.xlu0 %1853
        %v1855 = vmul.f32 %v1854, %v1476
        %v1856 = vadd.f32 %v1855, 1e-05
        %v1857 = vrsqrt.pop %v1856
        %v1858 = vmul.f32 %v1851, %v1857
        %v1860 = vlaneseq
        %v1861 = vshrl.u32 %v1860, 7
        %v1862 = vsub.s32 0, %v1861
        %v1863 = vrot.slane %v1846, %v1862
        %v1865 = vmul.f32 %v1858, %v1863
        %v1867 = vlaneseq
        %v1868 = vshrl.u32 %v1867, 7
        %v1869 = vsub.s32 0, %v1868
        %v1870 = vrot.slane %v1847, %v1869
        %v1872 = vadd.f32 %v1865, %v1870
        %1873 = vst [vmem:[%s780] sm:$0xff] %v1872
        %p1874 = scmp.lt.s32.totalorder %s37, 1
        %s1875 = scalar_select %p1874, %s37, 1
        %s1876 = smul.addr %s1875, 8
        %s1877 = scalar_lea.vmem %s16, %s1876
        // Predicated region
        $region97: #{roberta_class_forward.2} parent=83 // pred_check
          %p1878 = pneg %p469
        $region98: #{roberta_class_forward.2} parent=83 // pred_check_branch
          %1880 = sbr.rel (%p1878) target = $region100
        $region99: #{roberta_class_forward.2} parent=83 // pred_region
          _
        $region100: #{roberta_class_forward.2} parent=83 // pred_fallthru
          _
      $region84: #{roberta_class_forward.2} parent=5 // pred_fallthru
        _
      %p1881 = scmp.le.s32.totalorder 2, %s28
      // Predicated region
      $region101: #{roberta_class_forward.2} parent=5 // pred_check
        %p1882 = pneg %p1881
      $region102: #{roberta_class_forward.2} parent=5 // pred_check_branch
        %1884 = sbr.rel (%p1882) target = $region104
      $region103: #{roberta_class_forward.2} parent=5 // pred_region
        %s1885 = ssub.s32 %s28, 2
        // Predicated region
        $region105: #{roberta_class_forward.2} parent=103 // pred_check
          %p1886 = pneg %p475
        $region106: #{roberta_class_forward.2} parent=103 // pred_check_branch
          %1888 = sbr.rel (%p1886) target = $region108
        $region107: #{roberta_class_forward.2} parent=103 // pred_region
          %p1889 = scmp.lt.s32.totalorder %s39, 1
          %s1890 = scalar_select %p1889, %s39, 1
          %s1891 = smul.addr %s1890, 8
          %s1892 = scalar_lea.vmem %s16, %s1891
        $region108: #{roberta_class_forward.2} parent=103 // pred_fallthru
          _
      $region104: #{roberta_class_forward.2} parent=5 // pred_fallthru
        _
    $region6: #{roberta_class_forward.2} parent=1 // loop_footer
      %s32 = sadd.s32 1, %s28
    $region7: #{roberta_class_forward.2} parent=1 // loop_footer_branch
      %27 = sbr.rel target = $region3
    $region8: #{roberta_class_forward.2} parent=1 // loop_exit
      _
    %1893 = vsyncpa [#allocation3], 1
    %s1894 = scalar_lea.sflag [#allocation3], 1
    %1895 = vsyncpa %s1894, 1
    %1896 = vsyncpa [#allocation5], 1
    %s1897 = scalar_lea.sflag [#allocation5], 1
    %1898 = vsyncpa %s1897, 1

</llo_original>
